<compile_context>
chip_gen: v5e
topology: v5e:2x2
jax: 0.10.0
libtpu: 0.0.40
codegen_flags: <defaults>
</compile_context>

<pallas_src>
import numpy as np
import jax
import jax.numpy as jnp
from jax import lax
from jax.experimental import pallas as pl
from jax.experimental.pallas import tpu as pltpu


def _r8(c):
    return ((c + 7) // 8) * 8


def _pad_axis(a, axis, size):
    if a.shape[axis] == size:
        return a
    pad = [(0, 0)] * a.ndim
    pad[axis] = (0, size - a.shape[axis])
    return jnp.pad(a, pad)


# ---------------------------------------------------------------------------
# Fused kernel: one grid step == one sample, channel-major (C, M) throughout.
# ---------------------------------------------------------------------------
def _make_sep_inc_kernel(Cin, T, H, W, P0, Csp, Ctm, P1, P2, P3):
    M = T * H * W
    S = H * W
    C2 = 2 * Csp

    def kernel(x_ref, mw_ref, mh_ref, mt_ref,
               wh_ref, bh_ref, wsp_ref, bsp_ref, wt_ref, bt_ref,
               ew_ref, eb_ref, w3_ref, b3_ref, o_ref):
        x_cm = x_ref[0]                                       # (Cin, M), lane-dense

        # ---- merged 1x1x1 convs: branch0 | branch1 head | branch2 head ------
        hh = jnp.dot(wh_ref[...], x_cm, preferred_element_type=jnp.float32)
        hh = jnp.maximum(hh + bh_ref[...], 0.0)               # (P0 + 2*Csp, M)
        o_ref[0, 0:P0, :] = hh[0:P0, :]                       # branch0
        h12 = hh[P0:P0 + C2, :]                               # both branch heads

        # ---- (1,3,3) conv for BOTH branches: roll+mask im2col, one matmul ---
        cols = []
        for k in range(9):
            dh, dw = k // 3 - 1, k % 3 - 1
            off = dh * W + dw
            r = h12 if off == 0 else pltpu.roll(h12, (-off) % M, axis=1)
            cols.append(r * (mh_ref[dh + 1] * mw_ref[dw + 1]))
        col_sp = jnp.concatenate(cols, axis=0)                # (9*2*Csp, M)
        ysp = jnp.dot(wsp_ref[...], col_sp, preferred_element_type=jnp.float32)
        ysp = jnp.maximum(ysp + bsp_ref[...], 0.0)            # (2*Ctm, M)

        # ---- (3,1,1) conv for BOTH branches ---------------------------------
        colt = []
        for j in range(3):
            off = (j - 1) * S
            r = ysp if off == 0 else pltpu.roll(ysp, (-off) % M, axis=1)
            colt.append(r * mt_ref[j])
        col_t = jnp.concatenate(colt, axis=0)                 # (3*2*Ctm, M)
        yt = jnp.dot(wt_ref[...], col_t, preferred_element_type=jnp.float32)
        yt = jnp.maximum(yt + bt_ref[...], 0.0)               # (P1+P2, M)

        # ---- SE gates (block-diagonal excitation for both branches) ---------
        mean = jnp.mean(yt, axis=1, keepdims=True)            # (P1+P2, 1)
        g = jnp.dot(ew_ref[...], mean,
                    preferred_element_type=jnp.float32) + eb_ref[...]
        gate = pl.reciprocal(1.0 + jnp.exp(-g), approx=True)  # sigmoid via EUP
        o_ref[0, P0:P0 + P1 + P2, :] = yt * gate              # branch1 | branch2

        # ---- branch3: separable 3x3x3 max pool (roll + -inf mask) + 1x1x1 ---
        def dirmax(v, mref, stride):
            m_lo, m_hi = mref[0], mref[2]                     # (1, M) each
            lo = pltpu.roll(v, stride, axis=1) * m_lo + (m_lo - 1.0) * 3.0e38
            hi = pltpu.roll(v, M - stride, axis=1) * m_hi + (m_hi - 1.0) * 3.0e38
            return jnp.maximum(jnp.maximum(lo, v), hi)

        pool = dirmax(x_cm, mw_ref, 1)                        # max over W
        pool = dirmax(pool, mh_ref, W)                        # max over H
        pool = dirmax(pool, mt_ref, S)                        # max over T
        y3 = jnp.dot(w3_ref[...], pool, preferred_element_type=jnp.float32)
        y3 = jnp.maximum(y3 + b3_ref[...], 0.0)               # (P3, M)
        o_ref[0, P0 + P1 + P2:P0 + P1 + P2 + P3, :] = y3

    return kernel


# ---------------------------------------------------------------------------
# Wrapper: fold BN, pad channels to 8-multiples, single pallas_call.
# ---------------------------------------------------------------------------
def sep_inc_forward(x_ncthw, p):
    N, Cin, T, H, W = x_ncthw.shape
    M, S = T * H * W, H * W
    f32 = jnp.float32

    oc0 = p['w0'].shape[-1]
    oc1 = p['w1a'].shape[-1]
    oc2 = p['w1d'].shape[-1]
    oc3 = p['w2a'].shape[-1]
    oc4 = p['w2d'].shape[-1]
    oc5 = p['w3'].shape[-1]

    P0, P1, P2, P3 = _r8(oc0), _r8(oc2), _r8(oc4), _r8(oc5)
    Csp = max(_r8(oc1), _r8(oc3))       # padded width of sep-conv inputs
    Ctm = max(P1, P2)                   # padded width of (1,3,3) conv outputs
    C2, Cm2 = 2 * Csp, 2 * Ctm
    Ctot_pad = P0 + P1 + P2 + P3

    # -- 1x1x1 convs (BN folded) --------------------------------------------
    def pw_fold(w, bn, cout_pad):
        s, b = bn
        return (_pad_axis(w[0, 0, 0] * s, 1, cout_pad),       # (Cin, cout_pad)
                _pad_axis(b, 1, cout_pad))                    # (1, cout_pad)

    w0f, b0f = pw_fold(p['w0'], p['bn0'], P0)
    w1f, b1f = pw_fold(p['w1a'], p['bn1a'], Csp)
    w2f, b2f = pw_fold(p['w2a'], p['bn2a'], Csp)
    wh = jnp.concatenate([w0f, w1f, w2f], axis=1).T           # (P0+C2, Cin)
    bh = jnp.concatenate([b0f, b1f, b2f], axis=1).T           # (P0+C2, 1)

    # -- (1,3,3) convs, both branches in one block-structured matmul ---------
    def sp_fold(w, bn, ci_pad, co_pad):
        s, b = bn
        wf = w[0] * s.reshape(1, 1, 1, -1)                    # (3,3,ci,co)
        wf = _pad_axis(_pad_axis(wf, 2, ci_pad), 3, co_pad)
        return wf, _pad_axis(b, 1, co_pad).T                  # (co_pad, 1)

    wsp1, bsp1 = sp_fold(p['w1d'], p['bn1d'], Csp, Ctm)
    wsp2, bsp2 = sp_fold(p['w2d'], p['bn2d'], Csp, Ctm)
    zsp = jnp.zeros((Ctm, Csp), f32)
    wsp12 = jnp.concatenate(
        [jnp.concatenate(
            [jnp.concatenate([wsp1[kh, kw].T, zsp], axis=1),
             jnp.concatenate([zsp, wsp2[kh, kw].T], axis=1)], axis=0)
         for kh in range(3) for kw in range(3)], axis=1)      # (Cm2, 9*C2)
    bsp12 = jnp.concatenate([bsp1, bsp2], axis=0)             # (Cm2, 1)

    # -- (3,1,1) convs, both branches in one block-structured matmul ---------
    def t_fold(w, bn, ci_pad, co_pad):
        s, b = bn
        wf = w[:, 0, 0] * s.reshape(1, 1, -1)                 # (3, ci, co)
        wf = _pad_axis(_pad_axis(wf, 1, ci_pad), 2, co_pad)
        return wf, _pad_axis(b, 1, co_pad).T

    wt1, bt1 = t_fold(p['w1u'], p['bn1u'], Ctm, P1)
    wt2, bt2 = t_fold(p['w2u'], p['bn2u'], Ctm, P2)
    wt12 = jnp.concatenate(
        [jnp.concatenate(
            [jnp.concatenate([wt1[kt].T, jnp.zeros((P1, Ctm), f32)], axis=1),
             jnp.concatenate([jnp.zeros((P2, Ctm), f32), wt2[kt].T], axis=1)],
            axis=0)
         for kt in range(3)], axis=1)                         # (P1+P2, 3*Cm2)
    bt12 = jnp.concatenate([bt1, bt2], axis=0)                # (P1+P2, 1)

    # -- SE excitation (block-diagonal across branches) ----------------------
    def se_fold(ew, eb, width):
        return (_pad_axis(_pad_axis(ew, 0, width), 1, width).T,
                _pad_axis(eb, 1, width).T)

    ew1p, eb1p = se_fold(p['ew1'], p['eb1'], P1)
    ew2p, eb2p = se_fold(p['ew2'], p['eb2'], P2)
    ew12 = jnp.concatenate(
        [jnp.concatenate([ew1p, jnp.zeros((P1, P2), f32)], axis=1),
         jnp.concatenate([jnp.zeros((P2, P1), f32), ew2p], axis=1)], axis=0)
    eb12 = jnp.concatenate([eb1p, eb2p], axis=0)              # (P1+P2, 1)

    # -- branch3 tail 1x1x1 conv ---------------------------------------------
    w3f, b3f = pw_fold(p['w3'], p['bn3'], P3)
    w3t, b3t = w3f.T, b3f.T                                   # (P3, Cin), (P3, 1)

    # -- 0/1 boundary masks for offsets -1 / 0 / +1 along W, H, T ------------
    def dim_masks(idx, size):
        return jnp.stack(
            [((idx + d >= 0) & (idx + d < size)).astype(f32).reshape(1, M)
             for d in (-1, 0, 1)], axis=0)                    # (3, 1, M)

    m_idx = jnp.arange(M)
    mw = dim_masks(m_idx % W, W)
    mh = dim_masks((m_idx // W) % H, H)
    mt = dim_masks(m_idx // S, T)

    kernel = _make_sep_inc_kernel(Cin, T, H, W, P0, Csp, Ctm, P1, P2, P3)

    def full(a):
        return pl.BlockSpec(a.shape, lambda n, _nd=a.ndim: (0,) * _nd)

    x2 = x_ncthw.reshape(N, Cin, M)        # free reshape, NCTHW order kept

    consts = [mw, mh, mt, wh, bh, wsp12, bsp12, wt12, bt12, ew12, eb12,
              w3t, b3t]

    out = pl.pallas_call(
        kernel,
        out_shape=jax.ShapeDtypeStruct((N, Ctot_pad, M), jnp.float32),
        grid=(N,),
        in_specs=[pl.BlockSpec((1, Cin, M), lambda n: (n, 0, 0))]
                 + [full(c) for c in consts],
        out_specs=pl.BlockSpec((1, Ctot_pad, M), lambda n: (n, 0, 0)),
        compiler_params=pltpu.CompilerParams(
            dimension_semantics=("parallel",)),   # v7x: samples -> 2 TCs
    )(x2, *consts)

    out5 = out.reshape(N, Ctot_pad, T, H, W)      # already NCTHW channel-major
    if (P0, P1, P2, P3) == (oc0, oc2, oc4, oc5):
        return out5
    offs = (0, P0, P0 + P1, P0 + P1 + P2)
    widths = (oc0, oc2, oc4, oc5)
    return jnp.concatenate(
        [lax.slice_in_dim(out5, o, o + w, axis=1) for o, w in zip(offs, widths)],
        axis=1)


# ---------------------------------------------------------------------------
# Parameter init (deterministic, synthetic)
# ---------------------------------------------------------------------------
def make_bn_fold(key, c, eps=1e-3):
    k1, k2, k3, k4 = jax.random.split(key, 4)
    gamma = 1.0 + 0.1 * jax.random.normal(k1, (c,), jnp.float32)
    beta = 0.1 * jax.random.normal(k2, (c,), jnp.float32)
    mean = 0.1 * jax.random.normal(k3, (c,), jnp.float32)
    var = jnp.abs(1.0 + 0.1 * jax.random.normal(k4, (c,), jnp.float32))
    scale = gamma / jnp.sqrt(var + eps)
    shift = beta - mean * scale
    return scale.reshape(1, c), shift.reshape(1, c)


def init_params(key, cin, oc):
    ks = jax.random.split(key, 20)
    w = lambda k, shape: (0.2 * jax.random.normal(k, shape, jnp.float32))
    p = {}
    p['w0'] = w(ks[0], (1, 1, 1, cin, oc[0]));        p['bn0'] = make_bn_fold(ks[1], oc[0])
    p['w1a'] = w(ks[2], (1, 1, 1, cin, oc[1]));       p['bn1a'] = make_bn_fold(ks[3], oc[1])
    p['w1d'] = w(ks[4], (1, 3, 3, oc[1], oc[2]));     p['bn1d'] = make_bn_fold(ks[5], oc[2])
    p['w1u'] = w(ks[6], (3, 1, 1, oc[2], oc[2]));     p['bn1u'] = make_bn_fold(ks[7], oc[2])
    p['ew1'] = w(ks[8], (oc[2], oc[2]))
    p['eb1'] = 0.1 * jax.random.normal(ks[9], (1, oc[2]), jnp.float32)
    p['w2a'] = w(ks[10], (1, 1, 1, cin, oc[3]));      p['bn2a'] = make_bn_fold(ks[11], oc[3])
    p['w2d'] = w(ks[12], (1, 3, 3, oc[3], oc[4]));    p['bn2d'] = make_bn_fold(ks[13], oc[4])
    p['w2u'] = w(ks[14], (3, 1, 1, oc[4], oc[4]));    p['bn2u'] = make_bn_fold(ks[15], oc[4])
    p['ew2'] = w(ks[16], (oc[4], oc[4]))
    p['eb2'] = 0.1 * jax.random.normal(ks[17], (1, oc[4]), jnp.float32)
    p['w3'] = w(ks[18], (1, 1, 1, cin, oc[5]));       p['bn3'] = make_bn_fold(ks[19], oc[5])
    return p


# ---------------------------------------------------------------------------
# Pure-JAX reference (correctness check only)
# ---------------------------------------------------------------------------
def _ref_conv_bn_relu(x, w, scale, shift, padding):
    y = lax.conv_general_dilated(
        x, w, (1, 1, 1), [(pd, pd) for pd in padding],
        dimension_numbers=('NDHWC', 'DHWIO', 'NDHWC'))
    y = y * scale.reshape(1, 1, 1, 1, -1) + shift.reshape(1, 1, 1, 1, -1)
    return jnp.maximum(y, 0.0)


def _ref_se(x, ew, eb):
    m = jnp.mean(x, axis=(1, 2, 3))
    g = jax.nn.sigmoid(m @ ew + eb.reshape(1, -1))
    return x * g[:, None, None, None, :]


def _ref_maxpool(x):
    return lax.reduce_window(x, -jnp.inf, lax.max, (1, 3, 3, 3, 1),
                             (1, 1, 1, 1, 1),
                             [(0, 0), (1, 1), (1, 1), (1, 1), (0, 0)])


def sep_inc_reference(x_ncthw, p):
    x = jnp.transpose(x_ncthw, (0, 2, 3, 4, 1))
    b0 = _ref_conv_bn_relu(x, p['w0'], *p['bn0'], (0, 0, 0))
    h = _ref_conv_bn_relu(x, p['w1a'], *p['bn1a'], (0, 0, 0))
    h = _ref_conv_bn_relu(h, p['w1d'], *p['bn1d'], (0, 1, 1))
    h = _ref_conv_bn_relu(h, p['w1u'], *p['bn1u'], (1, 0, 0))
    b1 = _ref_se(h, p['ew1'], p['eb1'])
    h = _ref_conv_bn_relu(x, p['w2a'], *p['bn2a'], (0, 0, 0))
    h = _ref_conv_bn_relu(h, p['w2d'], *p['bn2d'], (0, 1, 1))
    h = _ref_conv_bn_relu(h, p['w2u'], *p['bn2u'], (1, 0, 0))
    b2 = _ref_se(h, p['ew2'], p['eb2'])
    h = _ref_maxpool(x)
    b3 = _ref_conv_bn_relu(h, p['w3'], *p['bn3'], (0, 0, 0))
    out = jnp.concatenate([b0, b1, b2, b3], axis=-1)
    return jnp.transpose(out, (0, 4, 1, 2, 3))


# ---------------------------------------------------------------------------
# Main
# ---------------------------------------------------------------------------
if __name__ == "__main__":
    key = jax.random.PRNGKey(0)
    kx, kp = jax.random.split(key)

    N, Cin, T, H, W = 2, 4, 4, 8, 8
    oc = (8, 4, 8, 4, 8, 8)   # out_channel list for sep_inc

    x = jax.random.normal(kx, (N, Cin, T, H, W), jnp.float32)   # NCTHW like torch
    params = init_params(kp, Cin, oc)

    fwd = jax.jit(sep_inc_forward)
    out = jax.block_until_ready(fwd(x, params))

    expected_c = oc[0] + oc[2] + oc[4] + oc[5]
    assert out.shape == (N, expected_c, T, H, W), out.shape

    ref = sep_inc_reference(x, params)
    np.testing.assert_allclose(np.asarray(out), np.asarray(ref),
                               atol=1e-2, rtol=1e-2)

    print("KERNEL_OK")
</pallas_src>

<mosaic_0001>
module attributes {stable_mosaic.version = 11 : i64} {
  func.func @kernel(%arg0: i32, %arg1: memref<1x4x256xf32, #tpu.memory_space<vmem>>, %arg2: memref<3x1x256xf32, #tpu.memory_space<vmem>>, %arg3: memref<3x1x256xf32, #tpu.memory_space<vmem>>, %arg4: memref<3x1x256xf32, #tpu.memory_space<vmem>>, %arg5: memref<24x4xf32, #tpu.memory_space<vmem>>, %arg6: memref<24x1xf32, #tpu.memory_space<vmem>>, %arg7: memref<16x144xf32, #tpu.memory_space<vmem>>, %arg8: memref<16x1xf32, #tpu.memory_space<vmem>>, %arg9: memref<16x48xf32, #tpu.memory_space<vmem>>, %arg10: memref<16x1xf32, #tpu.memory_space<vmem>>, %arg11: memref<16x16xf32, #tpu.memory_space<vmem>>, %arg12: memref<16x1xf32, #tpu.memory_space<vmem>>, %arg13: memref<8x4xf32, #tpu.memory_space<vmem>>, %arg14: memref<8x1xf32, #tpu.memory_space<vmem>>, %arg15: memref<1x32x256xf32, #tpu.memory_space<vmem>>) attributes {dimension_semantics = [#tpu.dimension_semantics<parallel>], iteration_bounds = array<i64: 2>, scalar_prefetch = 0 : i64, scratch_operands = 0 : i64, tpu.core_type = #tpu.core_type<tc>, window_params = [{transform_indices = @transform_0, window_bounds = array<i64: 1, 4, 256>}, {pipeline_mode = #tpu.pipeline_mode<synchronous>, transform_indices = @transform_1, window_bounds = array<i64: 3, 1, 256>}, {pipeline_mode = #tpu.pipeline_mode<synchronous>, transform_indices = @transform_2, window_bounds = array<i64: 3, 1, 256>}, {pipeline_mode = #tpu.pipeline_mode<synchronous>, transform_indices = @transform_3, window_bounds = array<i64: 3, 1, 256>}, {pipeline_mode = #tpu.pipeline_mode<synchronous>, transform_indices = @transform_4, window_bounds = array<i64: 24, 4>}, {pipeline_mode = #tpu.pipeline_mode<synchronous>, transform_indices = @transform_5, window_bounds = array<i64: 24, 1>}, {pipeline_mode = #tpu.pipeline_mode<synchronous>, transform_indices = @transform_6, window_bounds = array<i64: 16, 144>}, {pipeline_mode = #tpu.pipeline_mode<synchronous>, transform_indices = @transform_7, window_bounds = array<i64: 16, 1>}, {pipeline_mode = #tpu.pipeline_mode<synchronous>, transform_indices = @transform_8, window_bounds = array<i64: 16, 48>}, {pipeline_mode = #tpu.pipeline_mode<synchronous>, transform_indices = @transform_9, window_bounds = array<i64: 16, 1>}, {pipeline_mode = #tpu.pipeline_mode<synchronous>, transform_indices = @transform_10, window_bounds = array<i64: 16, 16>}, {pipeline_mode = #tpu.pipeline_mode<synchronous>, transform_indices = @transform_11, window_bounds = array<i64: 16, 1>}, {pipeline_mode = #tpu.pipeline_mode<synchronous>, transform_indices = @transform_12, window_bounds = array<i64: 8, 4>}, {pipeline_mode = #tpu.pipeline_mode<synchronous>, transform_indices = @transform_13, window_bounds = array<i64: 8, 1>}, {transform_indices = @transform_14, window_bounds = array<i64: 1, 32, 256>}]} {
    %c0 = arith.constant 0 : index
    %c0_0 = arith.constant 0 : index
    %c0_1 = arith.constant 0 : index
    %0 = vector.load %arg1[%c0, %c0_0, %c0_1] : memref<1x4x256xf32, #tpu.memory_space<vmem>>, vector<1x4x256xf32>
    %1 = vector.shape_cast %0 : vector<1x4x256xf32> to vector<4x256xf32>
    %c0_2 = arith.constant 0 : index
    %c0_3 = arith.constant 0 : index
    %2 = vector.load %arg5[%c0_2, %c0_3] : memref<24x4xf32, #tpu.memory_space<vmem>>, vector<24x4xf32>
    %cst = arith.constant dense<0.000000e+00> : vector<24x256xf32>
    %3 = tpu.matmul %2, %1, %cst {dimension_numbers = #tpu.dot_dimension_numbers<[1], [0], [0], [1], [0, 0, 1, 1], [], []>} : vector<24x4xf32>, vector<4x256xf32>, vector<24x256xf32> -> vector<24x256xf32>
    %c0_4 = arith.constant 0 : index
    %c0_5 = arith.constant 0 : index
    %4 = vector.load %arg6[%c0_4, %c0_5] : memref<24x1xf32, #tpu.memory_space<vmem>>, vector<24x1xf32>
    %5 = vector.broadcast %4 : vector<24x1xf32> to vector<24x256xf32>
    %6 = arith.addf %3, %5 : vector<24x256xf32>
    %cst_6 = arith.constant 0.000000e+00 : f32
    %7 = vector.broadcast %cst_6 : f32 to vector<24x256xf32>
    %8 = arith.maximumf %6, %7 : vector<24x256xf32>
    %9 = vector.extract_strided_slice %8 {offsets = [0, 0], sizes = [8, 256], strides = [1, 1]} : vector<24x256xf32> to vector<8x256xf32>
    %c0_7 = arith.constant 0 : index
    %c0_8 = arith.constant 0 : index
    %c0_9 = arith.constant 0 : index
    %10 = vector.load %arg15[%c0_7, %c0_8, %c0_9] : memref<1x32x256xf32, #tpu.memory_space<vmem>>, vector<1x8x256xf32>
    %11 = vector.shape_cast %10 : vector<1x8x256xf32> to vector<8x256xf32>
    %12 = vector.shape_cast %9 : vector<8x256xf32> to vector<1x8x256xf32>
    tpu.vector_store %arg15[%c0_7, %c0_8, %c0_9], %12 {strides = array<i32>} : memref<1x32x256xf32, #tpu.memory_space<vmem>>, vector<1x8x256xf32>,
    %13 = vector.extract_strided_slice %8 {offsets = [8, 0], sizes = [16, 256], strides = [1, 1]} : vector<24x256xf32> to vector<16x256xf32>
    %c9_i32 = arith.constant 9 : i32
    %14 = tpu.dynamic_rotate %13 by %c9_i32 dim 1 : vector<16x256xf32>, i32 -> vector<16x256xf32>
    %c0_10 = arith.constant 0 : index
    %c0_11 = arith.constant 0 : index
    %c0_12 = arith.constant 0 : index
    %15 = vector.load %arg3[%c0_10, %c0_11, %c0_12] : memref<3x1x256xf32, #tpu.memory_space<vmem>>, vector<1x1x256xf32>
    %16 = vector.shape_cast %15 : vector<1x1x256xf32> to vector<1x256xf32>
    %c0_13 = arith.constant 0 : index
    %c0_14 = arith.constant 0 : index
    %c0_15 = arith.constant 0 : index
    %17 = vector.load %arg2[%c0_13, %c0_14, %c0_15] : memref<3x1x256xf32, #tpu.memory_space<vmem>>, vector<1x1x256xf32>
    %18 = vector.shape_cast %17 : vector<1x1x256xf32> to vector<1x256xf32>
    %19 = arith.mulf %16, %18 : vector<1x256xf32>
    %20 = vector.broadcast %19 : vector<1x256xf32> to vector<16x256xf32>
    %21 = arith.mulf %14, %20 : vector<16x256xf32>
    %c8_i32 = arith.constant 8 : i32
    %22 = tpu.dynamic_rotate %13 by %c8_i32 dim 1 : vector<16x256xf32>, i32 -> vector<16x256xf32>
    %c0_16 = arith.constant 0 : index
    %c0_17 = arith.constant 0 : index
    %c0_18 = arith.constant 0 : index
    %23 = vector.load %arg3[%c0_16, %c0_17, %c0_18] : memref<3x1x256xf32, #tpu.memory_space<vmem>>, vector<1x1x256xf32>
    %24 = vector.shape_cast %23 : vector<1x1x256xf32> to vector<1x256xf32>
    %c1 = arith.constant 1 : index
    %c0_19 = arith.constant 0 : index
    %c0_20 = arith.constant 0 : index
    %25 = vector.load %arg2[%c1, %c0_19, %c0_20] : memref<3x1x256xf32, #tpu.memory_space<vmem>>, vector<1x1x256xf32>
    %26 = vector.shape_cast %25 : vector<1x1x256xf32> to vector<1x256xf32>
    %27 = arith.mulf %24, %26 : vector<1x256xf32>
    %28 = vector.broadcast %27 : vector<1x256xf32> to vector<16x256xf32>
    %29 = arith.mulf %22, %28 : vector<16x256xf32>
    %c7_i32 = arith.constant 7 : i32
    %30 = tpu.dynamic_rotate %13 by %c7_i32 dim 1 : vector<16x256xf32>, i32 -> vector<16x256xf32>
    %c0_21 = arith.constant 0 : index
    %c0_22 = arith.constant 0 : index
    %c0_23 = arith.constant 0 : index
    %31 = vector.load %arg3[%c0_21, %c0_22, %c0_23] : memref<3x1x256xf32, #tpu.memory_space<vmem>>, vector<1x1x256xf32>
    %32 = vector.shape_cast %31 : vector<1x1x256xf32> to vector<1x256xf32>
    %c2 = arith.constant 2 : index
    %c0_24 = arith.constant 0 : index
    %c0_25 = arith.constant 0 : index
    %33 = vector.load %arg2[%c2, %c0_24, %c0_25] : memref<3x1x256xf32, #tpu.memory_space<vmem>>, vector<1x1x256xf32>
    %34 = vector.shape_cast %33 : vector<1x1x256xf32> to vector<1x256xf32>
    %35 = arith.mulf %32, %34 : vector<1x256xf32>
    %36 = vector.broadcast %35 : vector<1x256xf32> to vector<16x256xf32>
    %37 = arith.mulf %30, %36 : vector<16x256xf32>
    %c1_i32 = arith.constant 1 : i32
    %38 = tpu.dynamic_rotate %13 by %c1_i32 dim 1 : vector<16x256xf32>, i32 -> vector<16x256xf32>
    %c1_26 = arith.constant 1 : index
    %c0_27 = arith.constant 0 : index
    %c0_28 = arith.constant 0 : index
    %39 = vector.load %arg3[%c1_26, %c0_27, %c0_28] : memref<3x1x256xf32, #tpu.memory_space<vmem>>, vector<1x1x256xf32>
    %40 = vector.shape_cast %39 : vector<1x1x256xf32> to vector<1x256xf32>
    %c0_29 = arith.constant 0 : index
    %c0_30 = arith.constant 0 : index
    %c0_31 = arith.constant 0 : index
    %41 = vector.load %arg2[%c0_29, %c0_30, %c0_31] : memref<3x1x256xf32, #tpu.memory_space<vmem>>, vector<1x1x256xf32>
    %42 = vector.shape_cast %41 : vector<1x1x256xf32> to vector<1x256xf32>
    %43 = arith.mulf %40, %42 : vector<1x256xf32>
    %44 = vector.broadcast %43 : vector<1x256xf32> to vector<16x256xf32>
    %45 = arith.mulf %38, %44 : vector<16x256xf32>
    %c1_32 = arith.constant 1 : index
    %c0_33 = arith.constant 0 : index
    %c0_34 = arith.constant 0 : index
    %46 = vector.load %arg3[%c1_32, %c0_33, %c0_34] : memref<3x1x256xf32, #tpu.memory_space<vmem>>, vector<1x1x256xf32>
    %47 = vector.shape_cast %46 : vector<1x1x256xf32> to vector<1x256xf32>
    %c1_35 = arith.constant 1 : index
    %c0_36 = arith.constant 0 : index
    %c0_37 = arith.constant 0 : index
    %48 = vector.load %arg2[%c1_35, %c0_36, %c0_37] : memref<3x1x256xf32, #tpu.memory_space<vmem>>, vector<1x1x256xf32>
    %49 = vector.shape_cast %48 : vector<1x1x256xf32> to vector<1x256xf32>
    %50 = arith.mulf %47, %49 : vector<1x256xf32>
    %51 = vector.broadcast %50 : vector<1x256xf32> to vector<16x256xf32>
    %52 = arith.mulf %13, %51 : vector<16x256xf32>
    %c255_i32 = arith.constant 255 : i32
    %53 = tpu.dynamic_rotate %13 by %c255_i32 dim 1 : vector<16x256xf32>, i32 -> vector<16x256xf32>
    %c1_38 = arith.constant 1 : index
    %c0_39 = arith.constant 0 : index
    %c0_40 = arith.constant 0 : index
    %54 = vector.load %arg3[%c1_38, %c0_39, %c0_40] : memref<3x1x256xf32, #tpu.memory_space<vmem>>, vector<1x1x256xf32>
    %55 = vector.shape_cast %54 : vector<1x1x256xf32> to vector<1x256xf32>
    %c2_41 = arith.constant 2 : index
    %c0_42 = arith.constant 0 : index
    %c0_43 = arith.constant 0 : index
    %56 = vector.load %arg2[%c2_41, %c0_42, %c0_43] : memref<3x1x256xf32, #tpu.memory_space<vmem>>, vector<1x1x256xf32>
    %57 = vector.shape_cast %56 : vector<1x1x256xf32> to vector<1x256xf32>
    %58 = arith.mulf %55, %57 : vector<1x256xf32>
    %59 = vector.broadcast %58 : vector<1x256xf32> to vector<16x256xf32>
    %60 = arith.mulf %53, %59 : vector<16x256xf32>
    %c249_i32 = arith.constant 249 : i32
    %61 = tpu.dynamic_rotate %13 by %c249_i32 dim 1 : vector<16x256xf32>, i32 -> vector<16x256xf32>
    %c2_44 = arith.constant 2 : index
    %c0_45 = arith.constant 0 : index
    %c0_46 = arith.constant 0 : index
    %62 = vector.load %arg3[%c2_44, %c0_45, %c0_46] : memref<3x1x256xf32, #tpu.memory_space<vmem>>, vector<1x1x256xf32>
    %63 = vector.shape_cast %62 : vector<1x1x256xf32> to vector<1x256xf32>
    %c0_47 = arith.constant 0 : index
    %c0_48 = arith.constant 0 : index
    %c0_49 = arith.constant 0 : index
    %64 = vector.load %arg2[%c0_47, %c0_48, %c0_49] : memref<3x1x256xf32, #tpu.memory_space<vmem>>, vector<1x1x256xf32>
    %65 = vector.shape_cast %64 : vector<1x1x256xf32> to vector<1x256xf32>
    %66 = arith.mulf %63, %65 : vector<1x256xf32>
    %67 = vector.broadcast %66 : vector<1x256xf32> to vector<16x256xf32>
    %68 = arith.mulf %61, %67 : vector<16x256xf32>
    %c248_i32 = arith.constant 248 : i32
    %69 = tpu.dynamic_rotate %13 by %c248_i32 dim 1 : vector<16x256xf32>, i32 -> vector<16x256xf32>
    %c2_50 = arith.constant 2 : index
    %c0_51 = arith.constant 0 : index
    %c0_52 = arith.constant 0 : index
    %70 = vector.load %arg3[%c2_50, %c0_51, %c0_52] : memref<3x1x256xf32, #tpu.memory_space<vmem>>, vector<1x1x256xf32>
    %71 = vector.shape_cast %70 : vector<1x1x256xf32> to vector<1x256xf32>
    %c1_53 = arith.constant 1 : index
    %c0_54 = arith.constant 0 : index
    %c0_55 = arith.constant 0 : index
    %72 = vector.load %arg2[%c1_53, %c0_54, %c0_55] : memref<3x1x256xf32, #tpu.memory_space<vmem>>, vector<1x1x256xf32>
    %73 = vector.shape_cast %72 : vector<1x1x256xf32> to vector<1x256xf32>
    %74 = arith.mulf %71, %73 : vector<1x256xf32>
    %75 = vector.broadcast %74 : vector<1x256xf32> to vector<16x256xf32>
    %76 = arith.mulf %69, %75 : vector<16x256xf32>
    %c247_i32 = arith.constant 247 : i32
    %77 = tpu.dynamic_rotate %13 by %c247_i32 dim 1 : vector<16x256xf32>, i32 -> vector<16x256xf32>
    %c2_56 = arith.constant 2 : index
    %c0_57 = arith.constant 0 : index
    %c0_58 = arith.constant 0 : index
    %78 = vector.load %arg3[%c2_56, %c0_57, %c0_58] : memref<3x1x256xf32, #tpu.memory_space<vmem>>, vector<1x1x256xf32>
    %79 = vector.shape_cast %78 : vector<1x1x256xf32> to vector<1x256xf32>
    %c2_59 = arith.constant 2 : index
    %c0_60 = arith.constant 0 : index
    %c0_61 = arith.constant 0 : index
    %80 = vector.load %arg2[%c2_59, %c0_60, %c0_61] : memref<3x1x256xf32, #tpu.memory_space<vmem>>, vector<1x1x256xf32>
    %81 = vector.shape_cast %80 : vector<1x1x256xf32> to vector<1x256xf32>
    %82 = arith.mulf %79, %81 : vector<1x256xf32>
    %83 = vector.broadcast %82 : vector<1x256xf32> to vector<16x256xf32>
    %84 = arith.mulf %77, %83 : vector<16x256xf32>
    %85 = tpu.concatenate %21, %29, %37, %45, %52, %60, %68, %76, %84 in 0 : vector<16x256xf32>, vector<16x256xf32>, vector<16x256xf32>, vector<16x256xf32>, vector<16x256xf32>, vector<16x256xf32>, vector<16x256xf32>, vector<16x256xf32>, vector<16x256xf32> -> vector<144x256xf32>
    %c0_62 = arith.constant 0 : index
    %c0_63 = arith.constant 0 : index
    %86 = vector.load %arg7[%c0_62, %c0_63] : memref<16x144xf32, #tpu.memory_space<vmem>>, vector<16x144xf32>
    %cst_64 = arith.constant dense<0.000000e+00> : vector<16x256xf32>
    %87 = tpu.matmul %86, %85, %cst_64 {dimension_numbers = #tpu.dot_dimension_numbers<[1], [0], [0], [1], [0, 0, 1, 1], [], []>} : vector<16x144xf32>, vector<144x256xf32>, vector<16x256xf32> -> vector<16x256xf32>
    %c0_65 = arith.constant 0 : index
    %c0_66 = arith.constant 0 : index
    %88 = vector.load %arg8[%c0_65, %c0_66] : memref<16x1xf32, #tpu.memory_space<vmem>>, vector<16x1xf32>
    %89 = vector.broadcast %88 : vector<16x1xf32> to vector<16x256xf32>
    %90 = arith.addf %87, %89 : vector<16x256xf32>
    %cst_67 = arith.constant 0.000000e+00 : f32
    %91 = vector.broadcast %cst_67 : f32 to vector<16x256xf32>
    %92 = arith.maximumf %90, %91 : vector<16x256xf32>
    %c64_i32 = arith.constant 64 : i32
    %93 = tpu.dynamic_rotate %92 by %c64_i32 dim 1 : vector<16x256xf32>, i32 -> vector<16x256xf32>
    %c0_68 = arith.constant 0 : index
    %c0_69 = arith.constant 0 : index
    %c0_70 = arith.constant 0 : index
    %94 = vector.load %arg4[%c0_68, %c0_69, %c0_70] : memref<3x1x256xf32, #tpu.memory_space<vmem>>, vector<1x1x256xf32>
    %95 = vector.shape_cast %94 : vector<1x1x256xf32> to vector<1x256xf32>
    %96 = vector.broadcast %95 : vector<1x256xf32> to vector<16x256xf32>
    %97 = arith.mulf %93, %96 : vector<16x256xf32>
    %c1_71 = arith.constant 1 : index
    %c0_72 = arith.constant 0 : index
    %c0_73 = arith.constant 0 : index
    %98 = vector.load %arg4[%c1_71, %c0_72, %c0_73] : memref<3x1x256xf32, #tpu.memory_space<vmem>>, vector<1x1x256xf32>
    %99 = vector.shape_cast %98 : vector<1x1x256xf32> to vector<1x256xf32>
    %100 = vector.broadcast %99 : vector<1x256xf32> to vector<16x256xf32>
    %101 = arith.mulf %92, %100 : vector<16x256xf32>
    %c192_i32 = arith.constant 192 : i32
    %102 = tpu.dynamic_rotate %92 by %c192_i32 dim 1 : vector<16x256xf32>, i32 -> vector<16x256xf32>
    %c2_74 = arith.constant 2 : index
    %c0_75 = arith.constant 0 : index
    %c0_76 = arith.constant 0 : index
    %103 = vector.load %arg4[%c2_74, %c0_75, %c0_76] : memref<3x1x256xf32, #tpu.memory_space<vmem>>, vector<1x1x256xf32>
    %104 = vector.shape_cast %103 : vector<1x1x256xf32> to vector<1x256xf32>
    %105 = vector.broadcast %104 : vector<1x256xf32> to vector<16x256xf32>
    %106 = arith.mulf %102, %105 : vector<16x256xf32>
    %107 = tpu.concatenate %97, %101, %106 in 0 : vector<16x256xf32>, vector<16x256xf32>, vector<16x256xf32> -> vector<48x256xf32>
    %c0_77 = arith.constant 0 : index
    %c0_78 = arith.constant 0 : index
    %108 = vector.load %arg9[%c0_77, %c0_78] : memref<16x48xf32, #tpu.memory_space<vmem>>, vector<16x48xf32>
    %cst_79 = arith.constant dense<0.000000e+00> : vector<16x256xf32>
    %109 = tpu.matmul %108, %107, %cst_79 {dimension_numbers = #tpu.dot_dimension_numbers<[1], [0], [0], [1], [0, 0, 1, 1], [], []>} : vector<16x48xf32>, vector<48x256xf32>, vector<16x256xf32> -> vector<16x256xf32>
    %c0_80 = arith.constant 0 : index
    %c0_81 = arith.constant 0 : index
    %110 = vector.load %arg10[%c0_80, %c0_81] : memref<16x1xf32, #tpu.memory_space<vmem>>, vector<16x1xf32>
    %111 = vector.broadcast %110 : vector<16x1xf32> to vector<16x256xf32>
    %112 = arith.addf %109, %111 : vector<16x256xf32>
    %cst_82 = arith.constant 0.000000e+00 : f32
    %113 = vector.broadcast %cst_82 : f32 to vector<16x256xf32>
    %114 = arith.maximumf %112, %113 : vector<16x256xf32>
    %cst_83 = arith.constant dense<0.000000e+00> : vector<16xf32>
    %115 = vector.multi_reduction <add>, %114, %cst_83 [1] : vector<16x256xf32> to vector<16xf32>
    %116 = vector.shape_cast %115 : vector<16xf32> to vector<16x1xf32>
    %cst_84 = arith.constant 2.560000e+02 : f32
    %117 = vector.broadcast %cst_84 : f32 to vector<16x1xf32>
    %118 = arith.divf %116, %117 : vector<16x1xf32>
    %c0_85 = arith.constant 0 : index
    %c0_86 = arith.constant 0 : index
    %119 = vector.load %arg11[%c0_85, %c0_86] : memref<16x16xf32, #tpu.memory_space<vmem>>, vector<16x16xf32>
    %cst_87 = arith.constant dense<0.000000e+00> : vector<16x1xf32>
    %120 = tpu.matmul %119, %118, %cst_87 {dimension_numbers = #tpu.dot_dimension_numbers<[1], [0], [0], [1], [0, 0, 1, 1], [], []>} : vector<16x16xf32>, vector<16x1xf32>, vector<16x1xf32> -> vector<16x1xf32>
    %c0_88 = arith.constant 0 : index
    %c0_89 = arith.constant 0 : index
    %121 = vector.load %arg12[%c0_88, %c0_89] : memref<16x1xf32, #tpu.memory_space<vmem>>, vector<16x1xf32>
    %122 = arith.addf %120, %121 : vector<16x1xf32>
    %cst_90 = arith.constant 0.000000e+00 : f32
    %123 = vector.broadcast %cst_90 : f32 to vector<16x1xf32>
    %124 = arith.subf %123, %122 : vector<16x1xf32>
    %125 = math.exp %124 : vector<16x1xf32>
    %cst_91 = arith.constant 1.000000e+00 : f32
    %126 = vector.broadcast %cst_91 : f32 to vector<16x1xf32>
    %127 = arith.addf %126, %125 : vector<16x1xf32>
    %128 = tpu.reciprocal %127 {approx = true} : vector<16x1xf32> -> vector<16x1xf32>
    %129 = vector.broadcast %128 : vector<16x1xf32> to vector<16x256xf32>
    %130 = arith.mulf %114, %129 : vector<16x256xf32>
    %c0_92 = arith.constant 0 : index
    %c8 = arith.constant 8 : index
    %c0_93 = arith.constant 0 : index
    %131 = vector.load %arg15[%c0_92, %c8, %c0_93] : memref<1x32x256xf32, #tpu.memory_space<vmem>>, vector<1x16x256xf32>
    %132 = vector.shape_cast %131 : vector<1x16x256xf32> to vector<16x256xf32>
    %133 = vector.shape_cast %130 : vector<16x256xf32> to vector<1x16x256xf32>
    tpu.vector_store %arg15[%c0_92, %c8, %c0_93], %133 {strides = array<i32>} : memref<1x32x256xf32, #tpu.memory_space<vmem>>, vector<1x16x256xf32>,
    %c0_94 = arith.constant 0 : index
    %c0_95 = arith.constant 0 : index
    %c0_96 = arith.constant 0 : index
    %134 = vector.load %arg2[%c0_94, %c0_95, %c0_96] : memref<3x1x256xf32, #tpu.memory_space<vmem>>, vector<1x1x256xf32>
    %135 = vector.shape_cast %134 : vector<1x1x256xf32> to vector<1x256xf32>
    %c2_97 = arith.constant 2 : index
    %c0_98 = arith.constant 0 : index
    %c0_99 = arith.constant 0 : index
    %136 = vector.load %arg2[%c2_97, %c0_98, %c0_99] : memref<3x1x256xf32, #tpu.memory_space<vmem>>, vector<1x1x256xf32>
    %137 = vector.shape_cast %136 : vector<1x1x256xf32> to vector<1x256xf32>
    %c1_i32_100 = arith.constant 1 : i32
    %138 = tpu.dynamic_rotate %1 by %c1_i32_100 dim 1 : vector<4x256xf32>, i32 -> vector<4x256xf32>
    %139 = vector.broadcast %135 : vector<1x256xf32> to vector<4x256xf32>
    %140 = arith.mulf %138, %139 : vector<4x256xf32>
    %cst_101 = arith.constant 1.000000e+00 : f32
    %141 = vector.broadcast %cst_101 : f32 to vector<1x256xf32>
    %142 = arith.subf %135, %141 : vector<1x256xf32>
    %cst_102 = arith.constant 3.000000e+38 : f32
    %143 = vector.broadcast %cst_102 : f32 to vector<1x256xf32>
    %144 = arith.mulf %142, %143 : vector<1x256xf32>
    %145 = vector.broadcast %144 : vector<1x256xf32> to vector<4x256xf32>
    %146 = arith.addf %140, %145 : vector<4x256xf32>
    %c255_i32_103 = arith.constant 255 : i32
    %147 = tpu.dynamic_rotate %1 by %c255_i32_103 dim 1 : vector<4x256xf32>, i32 -> vector<4x256xf32>
    %148 = vector.broadcast %137 : vector<1x256xf32> to vector<4x256xf32>
    %149 = arith.mulf %147, %148 : vector<4x256xf32>
    %cst_104 = arith.constant 1.000000e+00 : f32
    %150 = vector.broadcast %cst_104 : f32 to vector<1x256xf32>
    %151 = arith.subf %137, %150 : vector<1x256xf32>
    %cst_105 = arith.constant 3.000000e+38 : f32
    %152 = vector.broadcast %cst_105 : f32 to vector<1x256xf32>
    %153 = arith.mulf %151, %152 : vector<1x256xf32>
    %154 = vector.broadcast %153 : vector<1x256xf32> to vector<4x256xf32>
    %155 = arith.addf %149, %154 : vector<4x256xf32>
    %156 = arith.maximumf %146, %1 : vector<4x256xf32>
    %157 = arith.maximumf %156, %155 : vector<4x256xf32>
    %c0_106 = arith.constant 0 : index
    %c0_107 = arith.constant 0 : index
    %c0_108 = arith.constant 0 : index
    %158 = vector.load %arg3[%c0_106, %c0_107, %c0_108] : memref<3x1x256xf32, #tpu.memory_space<vmem>>, vector<1x1x256xf32>
    %159 = vector.shape_cast %158 : vector<1x1x256xf32> to vector<1x256xf32>
    %c2_109 = arith.constant 2 : index
    %c0_110 = arith.constant 0 : index
    %c0_111 = arith.constant 0 : index
    %160 = vector.load %arg3[%c2_109, %c0_110, %c0_111] : memref<3x1x256xf32, #tpu.memory_space<vmem>>, vector<1x1x256xf32>
    %161 = vector.shape_cast %160 : vector<1x1x256xf32> to vector<1x256xf32>
    %c8_i32_112 = arith.constant 8 : i32
    %162 = tpu.dynamic_rotate %157 by %c8_i32_112 dim 1 : vector<4x256xf32>, i32 -> vector<4x256xf32>
    %163 = vector.broadcast %159 : vector<1x256xf32> to vector<4x256xf32>
    %164 = arith.mulf %162, %163 : vector<4x256xf32>
    %cst_113 = arith.constant 1.000000e+00 : f32
    %165 = vector.broadcast %cst_113 : f32 to vector<1x256xf32>
    %166 = arith.subf %159, %165 : vector<1x256xf32>
    %cst_114 = arith.constant 3.000000e+38 : f32
    %167 = vector.broadcast %cst_114 : f32 to vector<1x256xf32>
    %168 = arith.mulf %166, %167 : vector<1x256xf32>
    %169 = vector.broadcast %168 : vector<1x256xf32> to vector<4x256xf32>
    %170 = arith.addf %164, %169 : vector<4x256xf32>
    %c248_i32_115 = arith.constant 248 : i32
    %171 = tpu.dynamic_rotate %157 by %c248_i32_115 dim 1 : vector<4x256xf32>, i32 -> vector<4x256xf32>
    %172 = vector.broadcast %161 : vector<1x256xf32> to vector<4x256xf32>
    %173 = arith.mulf %171, %172 : vector<4x256xf32>
    %cst_116 = arith.constant 1.000000e+00 : f32
    %174 = vector.broadcast %cst_116 : f32 to vector<1x256xf32>
    %175 = arith.subf %161, %174 : vector<1x256xf32>
    %cst_117 = arith.constant 3.000000e+38 : f32
    %176 = vector.broadcast %cst_117 : f32 to vector<1x256xf32>
    %177 = arith.mulf %175, %176 : vector<1x256xf32>
    %178 = vector.broadcast %177 : vector<1x256xf32> to vector<4x256xf32>
    %179 = arith.addf %173, %178 : vector<4x256xf32>
    %180 = arith.maximumf %170, %157 : vector<4x256xf32>
    %181 = arith.maximumf %180, %179 : vector<4x256xf32>
    %c0_118 = arith.constant 0 : index
    %c0_119 = arith.constant 0 : index
    %c0_120 = arith.constant 0 : index
    %182 = vector.load %arg4[%c0_118, %c0_119, %c0_120] : memref<3x1x256xf32, #tpu.memory_space<vmem>>, vector<1x1x256xf32>
    %183 = vector.shape_cast %182 : vector<1x1x256xf32> to vector<1x256xf32>
    %c2_121 = arith.constant 2 : index
    %c0_122 = arith.constant 0 : index
    %c0_123 = arith.constant 0 : index
    %184 = vector.load %arg4[%c2_121, %c0_122, %c0_123] : memref<3x1x256xf32, #tpu.memory_space<vmem>>, vector<1x1x256xf32>
    %185 = vector.shape_cast %184 : vector<1x1x256xf32> to vector<1x256xf32>
    %c64_i32_124 = arith.constant 64 : i32
    %186 = tpu.dynamic_rotate %181 by %c64_i32_124 dim 1 : vector<4x256xf32>, i32 -> vector<4x256xf32>
    %187 = vector.broadcast %183 : vector<1x256xf32> to vector<4x256xf32>
    %188 = arith.mulf %186, %187 : vector<4x256xf32>
    %cst_125 = arith.constant 1.000000e+00 : f32
    %189 = vector.broadcast %cst_125 : f32 to vector<1x256xf32>
    %190 = arith.subf %183, %189 : vector<1x256xf32>
    %cst_126 = arith.constant 3.000000e+38 : f32
    %191 = vector.broadcast %cst_126 : f32 to vector<1x256xf32>
    %192 = arith.mulf %190, %191 : vector<1x256xf32>
    %193 = vector.broadcast %192 : vector<1x256xf32> to vector<4x256xf32>
    %194 = arith.addf %188, %193 : vector<4x256xf32>
    %c192_i32_127 = arith.constant 192 : i32
    %195 = tpu.dynamic_rotate %181 by %c192_i32_127 dim 1 : vector<4x256xf32>, i32 -> vector<4x256xf32>
    %196 = vector.broadcast %185 : vector<1x256xf32> to vector<4x256xf32>
    %197 = arith.mulf %195, %196 : vector<4x256xf32>
    %cst_128 = arith.constant 1.000000e+00 : f32
    %198 = vector.broadcast %cst_128 : f32 to vector<1x256xf32>
    %199 = arith.subf %185, %198 : vector<1x256xf32>
    %cst_129 = arith.constant 3.000000e+38 : f32
    %200 = vector.broadcast %cst_129 : f32 to vector<1x256xf32>
    %201 = arith.mulf %199, %200 : vector<1x256xf32>
    %202 = vector.broadcast %201 : vector<1x256xf32> to vector<4x256xf32>
    %203 = arith.addf %197, %202 : vector<4x256xf32>
    %204 = arith.maximumf %194, %181 : vector<4x256xf32>
    %205 = arith.maximumf %204, %203 : vector<4x256xf32>
    %c0_130 = arith.constant 0 : index
    %c0_131 = arith.constant 0 : index
    %206 = vector.load %arg13[%c0_130, %c0_131] : memref<8x4xf32, #tpu.memory_space<vmem>>, vector<8x4xf32>
    %cst_132 = arith.constant dense<0.000000e+00> : vector<8x256xf32>
    %207 = tpu.matmul %206, %205, %cst_132 {dimension_numbers = #tpu.dot_dimension_numbers<[1], [0], [0], [1], [0, 0, 1, 1], [], []>} : vector<8x4xf32>, vector<4x256xf32>, vector<8x256xf32> -> vector<8x256xf32>
    %c0_133 = arith.constant 0 : index
    %c0_134 = arith.constant 0 : index
    %208 = vector.load %arg14[%c0_133, %c0_134] : memref<8x1xf32, #tpu.memory_space<vmem>>, vector<8x1xf32>
    %209 = vector.broadcast %208 : vector<8x1xf32> to vector<8x256xf32>
    %210 = arith.addf %207, %209 : vector<8x256xf32>
    %cst_135 = arith.constant 0.000000e+00 : f32
    %211 = vector.broadcast %cst_135 : f32 to vector<8x256xf32>
    %212 = arith.maximumf %210, %211 : vector<8x256xf32>
    %c0_136 = arith.constant 0 : index
    %c24 = arith.constant 24 : index
    %c0_137 = arith.constant 0 : index
    %213 = vector.load %arg15[%c0_136, %c24, %c0_137] : memref<1x32x256xf32, #tpu.memory_space<vmem>>, vector<1x8x256xf32>
    %214 = vector.shape_cast %213 : vector<1x8x256xf32> to vector<8x256xf32>
    %215 = vector.shape_cast %212 : vector<8x256xf32> to vector<1x8x256xf32>
    tpu.vector_store %arg15[%c0_136, %c24, %c0_137], %215 {strides = array<i32>} : memref<1x32x256xf32, #tpu.memory_space<vmem>>, vector<1x8x256xf32>,
    return
  }
  func.func @transform_0(%arg0: i32) -> (i32, i32, i32) {
    %c0_i32 = arith.constant 0 : i32
    %c0_i32_0 = arith.constant 0 : i32
    %c0_i32_1 = arith.constant 0 : i32
    return %arg0, %c0_i32, %c0_i32_0 : i32, i32, i32
  }
  func.func @transform_1(%arg0: i32) -> (i32, i32, i32) {
    %c0_i32 = arith.constant 0 : i32
    %c0_i32_0 = arith.constant 0 : i32
    %c0_i32_1 = arith.constant 0 : i32
    %c0_i32_2 = arith.constant 0 : i32
    return %c0_i32, %c0_i32_0, %c0_i32_1 : i32, i32, i32
  }
  func.func @transform_2(%arg0: i32) -> (i32, i32, i32) {
    %c0_i32 = arith.constant 0 : i32
    %c0_i32_0 = arith.constant 0 : i32
    %c0_i32_1 = arith.constant 0 : i32
    %c0_i32_2 = arith.constant 0 : i32
    return %c0_i32, %c0_i32_0, %c0_i32_1 : i32, i32, i32
  }
  func.func @transform_3(%arg0: i32) -> (i32, i32, i32) {
    %c0_i32 = arith.constant 0 : i32
    %c0_i32_0 = arith.constant 0 : i32
    %c0_i32_1 = arith.constant 0 : i32
    %c0_i32_2 = arith.constant 0 : i32
    return %c0_i32, %c0_i32_0, %c0_i32_1 : i32, i32, i32
  }
  func.func @transform_4(%arg0: i32) -> (i32, i32) {
    %c0_i32 = arith.constant 0 : i32
    %c0_i32_0 = arith.constant 0 : i32
    %c0_i32_1 = arith.constant 0 : i32
    return %c0_i32, %c0_i32_0 : i32, i32
  }
  func.func @transform_5(%arg0: i32) -> (i32, i32) {
    %c0_i32 = arith.constant 0 : i32
    %c0_i32_0 = arith.constant 0 : i32
    %c0_i32_1 = arith.constant 0 : i32
    return %c0_i32, %c0_i32_0 : i32, i32
  }
  func.func @transform_6(%arg0: i32) -> (i32, i32) {
    %c0_i32 = arith.constant 0 : i32
    %c0_i32_0 = arith.constant 0 : i32
    %c0_i32_1 = arith.constant 0 : i32
    return %c0_i32, %c0_i32_0 : i32, i32
  }
  func.func @transform_7(%arg0: i32) -> (i32, i32) {
    %c0_i32 = arith.constant 0 : i32
    %c0_i32_0 = arith.constant 0 : i32
    %c0_i32_1 = arith.constant 0 : i32
    return %c0_i32, %c0_i32_0 : i32, i32
  }
  func.func @transform_8(%arg0: i32) -> (i32, i32) {
    %c0_i32 = arith.constant 0 : i32
    %c0_i32_0 = arith.constant 0 : i32
    %c0_i32_1 = arith.constant 0 : i32
    return %c0_i32, %c0_i32_0 : i32, i32
  }
  func.func @transform_9(%arg0: i32) -> (i32, i32) {
    %c0_i32 = arith.constant 0 : i32
    %c0_i32_0 = arith.constant 0 : i32
    %c0_i32_1 = arith.constant 0 : i32
    return %c0_i32, %c0_i32_0 : i32, i32
  }
  func.func @transform_10(%arg0: i32) -> (i32, i32) {
    %c0_i32 = arith.constant 0 : i32
    %c0_i32_0 = arith.constant 0 : i32
    %c0_i32_1 = arith.constant 0 : i32
    return %c0_i32, %c0_i32_0 : i32, i32
  }
  func.func @transform_11(%arg0: i32) -> (i32, i32) {
    %c0_i32 = arith.constant 0 : i32
    %c0_i32_0 = arith.constant 0 : i32
    %c0_i32_1 = arith.constant 0 : i32
    return %c0_i32, %c0_i32_0 : i32, i32
  }
  func.func @transform_12(%arg0: i32) -> (i32, i32) {
    %c0_i32 = arith.constant 0 : i32
    %c0_i32_0 = arith.constant 0 : i32
    %c0_i32_1 = arith.constant 0 : i32
    return %c0_i32, %c0_i32_0 : i32, i32
  }
  func.func @transform_13(%arg0: i32) -> (i32, i32) {
    %c0_i32 = arith.constant 0 : i32
    %c0_i32_0 = arith.constant 0 : i32
    %c0_i32_1 = arith.constant 0 : i32
    return %c0_i32, %c0_i32_0 : i32, i32
  }
  func.func @transform_14(%arg0: i32) -> (i32, i32, i32) {
    %c0_i32 = arith.constant 0 : i32
    %c0_i32_0 = arith.constant 0 : i32
    %c0_i32_1 = arith.constant 0 : i32
    return %arg0, %c0_i32, %c0_i32_0 : i32, i32, i32
  }
}

</mosaic_0001>

<llo_original>
// kernel: sep_inc_forward.1
$region0: #{sep_inc_forward.1}
  #allocation0 [shape = 'u32[]', space=smem, size = 0x4, offset = 0x4, fixed_abs, tag = 'smem constant byte address 0x4 - core index']
  #allocation1 [shape = 'u32[72,128]{1,0:T(1,128)}', space=vmem, size = 0x9000, scoped, tag = 'internal scratch']
  %s0 = inlined_call_operand.vmem [shape: f32[2,4,256], index: 0, kind: input, shape index: {}]
  %s1 = inlined_call_operand.vmem [shape: f32[3,1,256], index: 1, kind: input, shape index: {}]
  %s2 = inlined_call_operand.vmem [shape: f32[3,1,256], index: 2, kind: input, shape index: {}]
  %s3 = inlined_call_operand.vmem [shape: f32[3,1,256], index: 3, kind: input, shape index: {}]
  %s4 = inlined_call_operand.vmem [shape: f32[24,4], index: 4, kind: input, shape index: {}]
  %s5 = inlined_call_operand.vmem [shape: f32[24,1], index: 5, kind: input, shape index: {}]
  %s6 = inlined_call_operand.vmem [shape: f32[16,144], index: 6, kind: input, shape index: {}]
  %s7 = inlined_call_operand.vmem [shape: f32[16,1], index: 7, kind: input, shape index: {}]
  %s8 = inlined_call_operand.vmem [shape: f32[16,48], index: 8, kind: input, shape index: {}]
  %s9 = inlined_call_operand.vmem [shape: f32[16,1], index: 9, kind: input, shape index: {}]
  %s10 = inlined_call_operand.vmem [shape: f32[16,16], index: 10, kind: input, shape index: {}]
  %s11 = inlined_call_operand.vmem [shape: f32[16,1], index: 11, kind: input, shape index: {}]
  %s12 = inlined_call_operand.vmem [shape: f32[8,4], index: 12, kind: input, shape index: {}]
  %s13 = inlined_call_operand.vmem [shape: f32[8,1], index: 13, kind: input, shape index: {}]
  %s14 = inlined_call_operand.vmem [shape: f32[2,32,256], index: 14, kind: output, shape index: {}]
  %s15 = sld [smem:[#allocation0]]
  $region89: #{sep_inc_forward.1} parent=0
    _
  %s17 = ssub.s32 1, %s15
  %s18 = scalar_select 0, %s17, %s15
  loop: start=0, step=1, limit=4
  $region2: #{sep_inc_forward.1} parent=0 // loop_pre_header
    _
  $region3: #{sep_inc_forward.1} parent=0 // loop_header
    %s20 = sphi 0, %s24
    %p21 = scmp.ge.s32.totalorder %s20, 4
    %s30 = sphi 0, %s32
    %s33 = sphi 0, %s30
    %s34 = sphi 0, %s33
    %s50 = sphi 0, %s34
    %s54 = sphi 0, %s54
    %s56 = sphi 0, %s54
    %s57 = sphi 0, %s56
    %s71 = sphi 0, %s57
    %s75 = sphi 0, %s75
    %s77 = sphi 0, %s75
    %s78 = sphi 0, %s77
    %s92 = sphi 0, %s78
    %s96 = sphi 0, %s96
    %s98 = sphi 0, %s96
    %s99 = sphi 0, %s98
    %s113 = sphi 0, %s99
    %s117 = sphi 0, %s117
    %s119 = sphi 0, %s117
    %s120 = sphi 0, %s119
    %s134 = sphi 0, %s120
    %s138 = sphi 0, %s138
    %s140 = sphi 0, %s138
    %s141 = sphi 0, %s140
    %s155 = sphi 0, %s141
    %s159 = sphi 0, %s159
    %s161 = sphi 0, %s159
    %s162 = sphi 0, %s161
    %s176 = sphi 0, %s162
    %s180 = sphi 0, %s180
    %s182 = sphi 0, %s180
    %s183 = sphi 0, %s182
    %s197 = sphi 0, %s183
    %s201 = sphi 0, %s201
    %s203 = sphi 0, %s201
    %s204 = sphi 0, %s203
    %s218 = sphi 0, %s204
    %s222 = sphi 0, %s222
    %s224 = sphi 0, %s222
    %s225 = sphi 0, %s224
    %s239 = sphi 0, %s225
    %s243 = sphi 0, %s243
    %s245 = sphi 0, %s243
    %s246 = sphi 0, %s245
    %s260 = sphi 0, %s246
    %s264 = sphi 0, %s264
    %s266 = sphi 0, %s264
    %s267 = sphi 0, %s266
    %s281 = sphi 0, %s267
    %s285 = sphi 0, %s285
    %s287 = sphi 0, %s285
    %s288 = sphi 0, %s287
    %s302 = sphi 0, %s288
    %s306 = sphi 0, %s306
    %s308 = sphi 0, %s306
    %s309 = sphi 0, %s308
    %s323 = sphi 0, %s309
    %s329 = sphi 0, %s331
    %s332 = sphi 0, %s329
    %s333 = sphi 0, %s332
    %s349 = sphi 0, %s333
  $region4: #{sep_inc_forward.1} parent=0 // loop_header_branch
    %23 = sbr.rel (%p21) target = $region8
  $region5: #{sep_inc_forward.1} parent=0 // loop_body
    %s25 = ssub.s32 %s20, 1
    %s26 = ssub.s32 %s20, 2
    %s27 = sadd.s32 %s20, 1
    %s28 = ssub.s32 %s20, %s27
    %p29 = scmp.eq.s32.totalorder %s28, 0
    %s31 = sadd.s32 %s30, 1
    %s32 = scalar_select %p29, %s30, %s31
    %p35 = pneg %p29
    %p36 = scmp.eq.s32.totalorder %s20, 1
    %p37 = por %p35, %p36
    %p38 = scmp.ne.s32.totalorder %s30, %s33
    %p39 = scmp.eq.s32.totalorder %s20, 0
    %p40 = por %p38, %p39
    %p41 = scmp.ne.s32.totalorder %s30, %s33
    %p42 = scmp.eq.s32.totalorder %s25, 1
    %p43 = por %p41, %p42
    %p44 = scmp.ne.s32.totalorder %s33, %s34
    %p45 = scmp.eq.s32.totalorder %s25, 0
    %p46 = por %p44, %p45
    %p47 = scmp.ne.s32.totalorder %s33, %s34
    %p48 = scmp.eq.s32.totalorder %s26, 1
    %p49 = por %p47, %p48
    %p51 = scmp.ne.s32.totalorder %s34, %s50
    %p52 = scmp.eq.s32.totalorder %s26, 0
    %p53 = por %p51, %p52
    %s55 = sadd.s32 %s54, 1
    %p58 = scmp.eq.s32.totalorder %s20, 1
    %p59 = scmp.ne.s32.totalorder %s54, %s56
    %p60 = scmp.eq.s32.totalorder %s20, 0
    %p61 = por %p59, %p60
    %p62 = scmp.ne.s32.totalorder %s54, %s56
    %p63 = scmp.eq.s32.totalorder %s25, 1
    %p64 = por %p62, %p63
    %p65 = scmp.ne.s32.totalorder %s56, %s57
    %p66 = scmp.eq.s32.totalorder %s25, 0
    %p67 = por %p65, %p66
    %p68 = scmp.ne.s32.totalorder %s56, %s57
    %p69 = scmp.eq.s32.totalorder %s26, 1
    %p70 = por %p68, %p69
    %p72 = scmp.ne.s32.totalorder %s57, %s71
    %p73 = scmp.eq.s32.totalorder %s26, 0
    %p74 = por %p72, %p73
    %s76 = sadd.s32 %s75, 1
    %p79 = scmp.eq.s32.totalorder %s20, 1
    %p80 = scmp.ne.s32.totalorder %s75, %s77
    %p81 = scmp.eq.s32.totalorder %s20, 0
    %p82 = por %p80, %p81
    %p83 = scmp.ne.s32.totalorder %s75, %s77
    %p84 = scmp.eq.s32.totalorder %s25, 1
    %p85 = por %p83, %p84
    %p86 = scmp.ne.s32.totalorder %s77, %s78
    %p87 = scmp.eq.s32.totalorder %s25, 0
    %p88 = por %p86, %p87
    %p89 = scmp.ne.s32.totalorder %s77, %s78
    %p90 = scmp.eq.s32.totalorder %s26, 1
    %p91 = por %p89, %p90
    %p93 = scmp.ne.s32.totalorder %s78, %s92
    %p94 = scmp.eq.s32.totalorder %s26, 0
    %p95 = por %p93, %p94
    %s97 = sadd.s32 %s96, 1
    %p100 = scmp.eq.s32.totalorder %s20, 1
    %p101 = scmp.ne.s32.totalorder %s96, %s98
    %p102 = scmp.eq.s32.totalorder %s20, 0
    %p103 = por %p101, %p102
    %p104 = scmp.ne.s32.totalorder %s96, %s98
    %p105 = scmp.eq.s32.totalorder %s25, 1
    %p106 = por %p104, %p105
    %p107 = scmp.ne.s32.totalorder %s98, %s99
    %p108 = scmp.eq.s32.totalorder %s25, 0
    %p109 = por %p107, %p108
    %p110 = scmp.ne.s32.totalorder %s98, %s99
    %p111 = scmp.eq.s32.totalorder %s26, 1
    %p112 = por %p110, %p111
    %p114 = scmp.ne.s32.totalorder %s99, %s113
    %p115 = scmp.eq.s32.totalorder %s26, 0
    %p116 = por %p114, %p115
    %s118 = sadd.s32 %s117, 1
    %p121 = scmp.eq.s32.totalorder %s20, 1
    %p122 = scmp.ne.s32.totalorder %s117, %s119
    %p123 = scmp.eq.s32.totalorder %s20, 0
    %p124 = por %p122, %p123
    %p125 = scmp.ne.s32.totalorder %s117, %s119
    %p126 = scmp.eq.s32.totalorder %s25, 1
    %p127 = por %p125, %p126
    %p128 = scmp.ne.s32.totalorder %s119, %s120
    %p129 = scmp.eq.s32.totalorder %s25, 0
    %p130 = por %p128, %p129
    %p131 = scmp.ne.s32.totalorder %s119, %s120
    %p132 = scmp.eq.s32.totalorder %s26, 1
    %p133 = por %p131, %p132
    %p135 = scmp.ne.s32.totalorder %s120, %s134
    %p136 = scmp.eq.s32.totalorder %s26, 0
    %p137 = por %p135, %p136
    %s139 = sadd.s32 %s138, 1
    %p142 = scmp.eq.s32.totalorder %s20, 1
    %p143 = scmp.ne.s32.totalorder %s138, %s140
    %p144 = scmp.eq.s32.totalorder %s20, 0
    %p145 = por %p143, %p144
    %p146 = scmp.ne.s32.totalorder %s138, %s140
    %p147 = scmp.eq.s32.totalorder %s25, 1
    %p148 = por %p146, %p147
    %p149 = scmp.ne.s32.totalorder %s140, %s141
    %p150 = scmp.eq.s32.totalorder %s25, 0
    %p151 = por %p149, %p150
    %p152 = scmp.ne.s32.totalorder %s140, %s141
    %p153 = scmp.eq.s32.totalorder %s26, 1
    %p154 = por %p152, %p153
    %p156 = scmp.ne.s32.totalorder %s141, %s155
    %p157 = scmp.eq.s32.totalorder %s26, 0
    %p158 = por %p156, %p157
    %s160 = sadd.s32 %s159, 1
    %p163 = scmp.eq.s32.totalorder %s20, 1
    %p164 = scmp.ne.s32.totalorder %s159, %s161
    %p165 = scmp.eq.s32.totalorder %s20, 0
    %p166 = por %p164, %p165
    %p167 = scmp.ne.s32.totalorder %s159, %s161
    %p168 = scmp.eq.s32.totalorder %s25, 1
    %p169 = por %p167, %p168
    %p170 = scmp.ne.s32.totalorder %s161, %s162
    %p171 = scmp.eq.s32.totalorder %s25, 0
    %p172 = por %p170, %p171
    %p173 = scmp.ne.s32.totalorder %s161, %s162
    %p174 = scmp.eq.s32.totalorder %s26, 1
    %p175 = por %p173, %p174
    %p177 = scmp.ne.s32.totalorder %s162, %s176
    %p178 = scmp.eq.s32.totalorder %s26, 0
    %p179 = por %p177, %p178
    %s181 = sadd.s32 %s180, 1
    %p184 = scmp.eq.s32.totalorder %s20, 1
    %p185 = scmp.ne.s32.totalorder %s180, %s182
    %p186 = scmp.eq.s32.totalorder %s20, 0
    %p187 = por %p185, %p186
    %p188 = scmp.ne.s32.totalorder %s180, %s182
    %p189 = scmp.eq.s32.totalorder %s25, 1
    %p190 = por %p188, %p189
    %p191 = scmp.ne.s32.totalorder %s182, %s183
    %p192 = scmp.eq.s32.totalorder %s25, 0
    %p193 = por %p191, %p192
    %p194 = scmp.ne.s32.totalorder %s182, %s183
    %p195 = scmp.eq.s32.totalorder %s26, 1
    %p196 = por %p194, %p195
    %p198 = scmp.ne.s32.totalorder %s183, %s197
    %p199 = scmp.eq.s32.totalorder %s26, 0
    %p200 = por %p198, %p199
    %s202 = sadd.s32 %s201, 1
    %p205 = scmp.eq.s32.totalorder %s20, 1
    %p206 = scmp.ne.s32.totalorder %s201, %s203
    %p207 = scmp.eq.s32.totalorder %s20, 0
    %p208 = por %p206, %p207
    %p209 = scmp.ne.s32.totalorder %s201, %s203
    %p210 = scmp.eq.s32.totalorder %s25, 1
    %p211 = por %p209, %p210
    %p212 = scmp.ne.s32.totalorder %s203, %s204
    %p213 = scmp.eq.s32.totalorder %s25, 0
    %p214 = por %p212, %p213
    %p215 = scmp.ne.s32.totalorder %s203, %s204
    %p216 = scmp.eq.s32.totalorder %s26, 1
    %p217 = por %p215, %p216
    %p219 = scmp.ne.s32.totalorder %s204, %s218
    %p220 = scmp.eq.s32.totalorder %s26, 0
    %p221 = por %p219, %p220
    %s223 = sadd.s32 %s222, 1
    %p226 = scmp.eq.s32.totalorder %s20, 1
    %p227 = scmp.ne.s32.totalorder %s222, %s224
    %p228 = scmp.eq.s32.totalorder %s20, 0
    %p229 = por %p227, %p228
    %p230 = scmp.ne.s32.totalorder %s222, %s224
    %p231 = scmp.eq.s32.totalorder %s25, 1
    %p232 = por %p230, %p231
    %p233 = scmp.ne.s32.totalorder %s224, %s225
    %p234 = scmp.eq.s32.totalorder %s25, 0
    %p235 = por %p233, %p234
    %p236 = scmp.ne.s32.totalorder %s224, %s225
    %p237 = scmp.eq.s32.totalorder %s26, 1
    %p238 = por %p236, %p237
    %p240 = scmp.ne.s32.totalorder %s225, %s239
    %p241 = scmp.eq.s32.totalorder %s26, 0
    %p242 = por %p240, %p241
    %s244 = sadd.s32 %s243, 1
    %p247 = scmp.eq.s32.totalorder %s20, 1
    %p248 = scmp.ne.s32.totalorder %s243, %s245
    %p249 = scmp.eq.s32.totalorder %s20, 0
    %p250 = por %p248, %p249
    %p251 = scmp.ne.s32.totalorder %s243, %s245
    %p252 = scmp.eq.s32.totalorder %s25, 1
    %p253 = por %p251, %p252
    %p254 = scmp.ne.s32.totalorder %s245, %s246
    %p255 = scmp.eq.s32.totalorder %s25, 0
    %p256 = por %p254, %p255
    %p257 = scmp.ne.s32.totalorder %s245, %s246
    %p258 = scmp.eq.s32.totalorder %s26, 1
    %p259 = por %p257, %p258
    %p261 = scmp.ne.s32.totalorder %s246, %s260
    %p262 = scmp.eq.s32.totalorder %s26, 0
    %p263 = por %p261, %p262
    %s265 = sadd.s32 %s264, 1
    %p268 = scmp.eq.s32.totalorder %s20, 1
    %p269 = scmp.ne.s32.totalorder %s264, %s266
    %p270 = scmp.eq.s32.totalorder %s20, 0
    %p271 = por %p269, %p270
    %p272 = scmp.ne.s32.totalorder %s264, %s266
    %p273 = scmp.eq.s32.totalorder %s25, 1
    %p274 = por %p272, %p273
    %p275 = scmp.ne.s32.totalorder %s266, %s267
    %p276 = scmp.eq.s32.totalorder %s25, 0
    %p277 = por %p275, %p276
    %p278 = scmp.ne.s32.totalorder %s266, %s267
    %p279 = scmp.eq.s32.totalorder %s26, 1
    %p280 = por %p278, %p279
    %p282 = scmp.ne.s32.totalorder %s267, %s281
    %p283 = scmp.eq.s32.totalorder %s26, 0
    %p284 = por %p282, %p283
    %s286 = sadd.s32 %s285, 1
    %p289 = scmp.eq.s32.totalorder %s20, 1
    %p290 = scmp.ne.s32.totalorder %s285, %s287
    %p291 = scmp.eq.s32.totalorder %s20, 0
    %p292 = por %p290, %p291
    %p293 = scmp.ne.s32.totalorder %s285, %s287
    %p294 = scmp.eq.s32.totalorder %s25, 1
    %p295 = por %p293, %p294
    %p296 = scmp.ne.s32.totalorder %s287, %s288
    %p297 = scmp.eq.s32.totalorder %s25, 0
    %p298 = por %p296, %p297
    %p299 = scmp.ne.s32.totalorder %s287, %s288
    %p300 = scmp.eq.s32.totalorder %s26, 1
    %p301 = por %p299, %p300
    %p303 = scmp.ne.s32.totalorder %s288, %s302
    %p304 = scmp.eq.s32.totalorder %s26, 0
    %p305 = por %p303, %p304
    %s307 = sadd.s32 %s306, 1
    %p310 = scmp.eq.s32.totalorder %s20, 1
    %p311 = scmp.ne.s32.totalorder %s306, %s308
    %p312 = scmp.eq.s32.totalorder %s20, 0
    %p313 = por %p311, %p312
    %p314 = scmp.ne.s32.totalorder %s306, %s308
    %p315 = scmp.eq.s32.totalorder %s25, 1
    %p316 = por %p314, %p315
    %p317 = scmp.ne.s32.totalorder %s308, %s309
    %p318 = scmp.eq.s32.totalorder %s25, 0
    %p319 = por %p317, %p318
    %p320 = scmp.ne.s32.totalorder %s308, %s309
    %p321 = scmp.eq.s32.totalorder %s26, 1
    %p322 = por %p320, %p321
    %p324 = scmp.ne.s32.totalorder %s309, %s323
    %p325 = scmp.eq.s32.totalorder %s26, 0
    %p326 = por %p324, %p325
    %s327 = ssub.s32 %s20, %s27
    %p328 = scmp.eq.s32.totalorder %s327, 0
    %s330 = sadd.s32 %s329, 1
    %s331 = scalar_select %p328, %s329, %s330
    %p334 = pneg %p328
    %p335 = scmp.eq.s32.totalorder %s20, 1
    %p336 = por %p334, %p335
    %p337 = scmp.ne.s32.totalorder %s329, %s332
    %p338 = scmp.eq.s32.totalorder %s20, 0
    %p339 = por %p337, %p338
    %p340 = scmp.ne.s32.totalorder %s329, %s332
    %p341 = scmp.eq.s32.totalorder %s25, 1
    %p342 = por %p340, %p341
    %p343 = scmp.ne.s32.totalorder %s332, %s333
    %p344 = scmp.eq.s32.totalorder %s25, 0
    %p345 = por %p343, %p344
    %p346 = scmp.ne.s32.totalorder %s332, %s333
    %p347 = scmp.eq.s32.totalorder %s26, 1
    %p348 = por %p346, %p347
    %p350 = scmp.ne.s32.totalorder %s333, %s349
    %p351 = scmp.eq.s32.totalorder %s26, 0
    %p352 = por %p350, %p351
    %p353 = scmp.le.s32.totalorder 1, %s20
    %p354 = scmp.lt.s32.totalorder %s20, 3
    %p355 = pnand %p353, %p354
    %p356 = pneg %p355
    // Predicated region
    $region9: #{sep_inc_forward.1} parent=5 // pred_check
      _
    $region10: #{sep_inc_forward.1} parent=5 // pred_check_branch
      %358 = sbr.rel (%p355) target = $region12
    $region11: #{sep_inc_forward.1} parent=5 // pred_region
      %s359 = ssub.s32 %s20, 1
      // Predicated region
      $region13: #{sep_inc_forward.1} parent=11 // pred_check
        %p360 = pneg %p67
      $region14: #{sep_inc_forward.1} parent=11 // pred_check_branch
        %362 = sbr.rel (%p360) target = $region16
      $region15: #{sep_inc_forward.1} parent=11 // pred_region
        _
      $region16: #{sep_inc_forward.1} parent=11 // pred_fallthru
        _
      // Predicated region
      $region17: #{sep_inc_forward.1} parent=11 // pred_check
        %p363 = pneg %p88
      $region18: #{sep_inc_forward.1} parent=11 // pred_check_branch
        %365 = sbr.rel (%p363) target = $region20
      $region19: #{sep_inc_forward.1} parent=11 // pred_region
        _
      $region20: #{sep_inc_forward.1} parent=11 // pred_fallthru
        _
      // Predicated region
      $region21: #{sep_inc_forward.1} parent=11 // pred_check
        %p366 = pneg %p109
      $region22: #{sep_inc_forward.1} parent=11 // pred_check_branch
        %368 = sbr.rel (%p366) target = $region24
      $region23: #{sep_inc_forward.1} parent=11 // pred_region
        _
      $region24: #{sep_inc_forward.1} parent=11 // pred_fallthru
        _
      // Predicated region
      $region25: #{sep_inc_forward.1} parent=11 // pred_check
        %p369 = pneg %p130
      $region26: #{sep_inc_forward.1} parent=11 // pred_check_branch
        %371 = sbr.rel (%p369) target = $region28
      $region27: #{sep_inc_forward.1} parent=11 // pred_region
        _
      $region28: #{sep_inc_forward.1} parent=11 // pred_fallthru
        _
      // Predicated region
      $region29: #{sep_inc_forward.1} parent=11 // pred_check
        %p372 = pneg %p151
      $region30: #{sep_inc_forward.1} parent=11 // pred_check_branch
        %374 = sbr.rel (%p372) target = $region32
      $region31: #{sep_inc_forward.1} parent=11 // pred_region
        _
      $region32: #{sep_inc_forward.1} parent=11 // pred_fallthru
        _
      // Predicated region
      $region33: #{sep_inc_forward.1} parent=11 // pred_check
        %p375 = pneg %p172
      $region34: #{sep_inc_forward.1} parent=11 // pred_check_branch
        %377 = sbr.rel (%p375) target = $region36
      $region35: #{sep_inc_forward.1} parent=11 // pred_region
        _
      $region36: #{sep_inc_forward.1} parent=11 // pred_fallthru
        _
      // Predicated region
      $region37: #{sep_inc_forward.1} parent=11 // pred_check
        %p378 = pneg %p193
      $region38: #{sep_inc_forward.1} parent=11 // pred_check_branch
        %380 = sbr.rel (%p378) target = $region40
      $region39: #{sep_inc_forward.1} parent=11 // pred_region
        _
      $region40: #{sep_inc_forward.1} parent=11 // pred_fallthru
        _
      // Predicated region
      $region41: #{sep_inc_forward.1} parent=11 // pred_check
        %p381 = pneg %p214
      $region42: #{sep_inc_forward.1} parent=11 // pred_check_branch
        %383 = sbr.rel (%p381) target = $region44
      $region43: #{sep_inc_forward.1} parent=11 // pred_region
        _
      $region44: #{sep_inc_forward.1} parent=11 // pred_fallthru
        _
      // Predicated region
      $region45: #{sep_inc_forward.1} parent=11 // pred_check
        %p384 = pneg %p235
      $region46: #{sep_inc_forward.1} parent=11 // pred_check_branch
        %386 = sbr.rel (%p384) target = $region48
      $region47: #{sep_inc_forward.1} parent=11 // pred_region
        _
      $region48: #{sep_inc_forward.1} parent=11 // pred_fallthru
        _
      // Predicated region
      $region49: #{sep_inc_forward.1} parent=11 // pred_check
        %p387 = pneg %p256
      $region50: #{sep_inc_forward.1} parent=11 // pred_check_branch
        %389 = sbr.rel (%p387) target = $region52
      $region51: #{sep_inc_forward.1} parent=11 // pred_region
        _
      $region52: #{sep_inc_forward.1} parent=11 // pred_fallthru
        _
      // Predicated region
      $region53: #{sep_inc_forward.1} parent=11 // pred_check
        %p390 = pneg %p277
      $region54: #{sep_inc_forward.1} parent=11 // pred_check_branch
        %392 = sbr.rel (%p390) target = $region56
      $region55: #{sep_inc_forward.1} parent=11 // pred_region
        _
      $region56: #{sep_inc_forward.1} parent=11 // pred_fallthru
        _
      // Predicated region
      $region57: #{sep_inc_forward.1} parent=11 // pred_check
        %p393 = pneg %p298
      $region58: #{sep_inc_forward.1} parent=11 // pred_check_branch
        %395 = sbr.rel (%p393) target = $region60
      $region59: #{sep_inc_forward.1} parent=11 // pred_region
        _
      $region60: #{sep_inc_forward.1} parent=11 // pred_fallthru
        _
      // Predicated region
      $region61: #{sep_inc_forward.1} parent=11 // pred_check
        %p396 = pneg %p319
      $region62: #{sep_inc_forward.1} parent=11 // pred_check_branch
        %398 = sbr.rel (%p396) target = $region64
      $region63: #{sep_inc_forward.1} parent=11 // pred_region
        _
      $region64: #{sep_inc_forward.1} parent=11 // pred_fallthru
        _
    $region12: #{sep_inc_forward.1} parent=5 // pred_fallthru
      _
    %p399 = scmp.lt.s32.totalorder %s20, 2
    // Predicated region
    $region65: #{sep_inc_forward.1} parent=5 // pred_check
      %p400 = pneg %p399
    $region66: #{sep_inc_forward.1} parent=5 // pred_check_branch
      %402 = sbr.rel (%p400) target = $region68
    $region67: #{sep_inc_forward.1} parent=5 // pred_region
      // Predicated region
      $region69: #{sep_inc_forward.1} parent=67 // pred_check
        %p403 = pneg %p40
      $region70: #{sep_inc_forward.1} parent=67 // pred_check_branch
        %405 = sbr.rel (%p403) target = $region72
      $region71: #{sep_inc_forward.1} parent=67 // pred_region
        %p406 = scmp.lt.s32.totalorder %s20, 1
        %s407 = scalar_select %p406, %s20, 1
        %s408 = smul.addr %s407, 2
        %s409 = smul.addr %s408, 4
        %s410 = scalar_lea.vmem %s0, %s409
      $region72: #{sep_inc_forward.1} parent=67 // pred_fallthru
        _
    $region68: #{sep_inc_forward.1} parent=5 // pred_fallthru
      _
    %p411 = scmp.le.s32.totalorder 1, %s20
    %p412 = scmp.lt.s32.totalorder %s20, 3
    %p413 = pnand %p411, %p412
    %p414 = pneg %p413
    // Predicated region
    $region73: #{sep_inc_forward.1} parent=5 // pred_check
      _
    $region74: #{sep_inc_forward.1} parent=5 // pred_check_branch
      %416 = sbr.rel (%p413) target = $region76
    $region75: #{sep_inc_forward.1} parent=5 // pred_region
      %s417 = ssub.s32 %s20, 1
      %p418 = scmp.lt.s32.totalorder %s25, 1
      %s419 = scalar_select %p418, %s25, 1
      %s420 = smul.addr %s419, 2
      %s421 = smul.addr %s420, 4
      %s422 = scalar_lea.vmem %s0, %s421
      %p423 = pneg %p46
      %p424 = pneg %p43
      %p425 = pneg %p67
      %p426 = pneg %p64
      %p427 = pneg %p88
      %p428 = pneg %p85
      %p429 = pneg %p109
      %p430 = pneg %p106
      %p431 = pneg %p130
      %p432 = pneg %p127
      %p433 = pneg %p151
      %p434 = pneg %p148
      %p435 = pneg %p172
      %p436 = pneg %p169
      %p437 = pneg %p193
      %p438 = pneg %p190
      %p439 = pneg %p214
      %p440 = pneg %p211
      %p441 = pneg %p235
      %p442 = pneg %p232
      %p443 = pneg %p256
      %p444 = pneg %p253
      %p445 = pneg %p277
      %p446 = pneg %p274
      %p447 = pneg %p298
      %p448 = pneg %p295
      %p449 = pneg %p319
      %p450 = pneg %p316
      %p451 = pneg %p345
      %p452 = pneg %p342
      %p453 = scmp.lt.s32.totalorder %s25, 1
      %s454 = scalar_select %p453, %s25, 1
      %s455 = smul.addr %s454, 8
      %s456 = smul.addr %s455, 8
      %s457 = scalar_lea.vmem %s14, %s456
      %p458 = scmp.lt.s32.totalorder %s25, 1
      %s459 = scalar_select %p458, %s25, 1
      %s460 = smul.addr %s459, 2
      %s461 = smul.addr %s460, 4
      %s462 = scalar_lea.vmem %s0, %s461
      %p463 = scmp.lt.s32.totalorder %s25, 1
      %s464 = scalar_select %p463, %s25, 1
      %s465 = smul.addr %s464, 8
      %s466 = smul.addr %s465, 8
      %s467 = scalar_lea.vmem %s14, %s466
      %v468 = vld [vmem:[%s462] sm:$0xff]
      %v469 = vld [vmem:[%s4] sm:$0xff]
      %v470 = vld [vmem:[%s4 + $0x8] sm:$0xff]
      %v471 = vld [vmem:[%s4 + $0x10] sm:$0xff]
      %v472 = vld [vmem:[%s5] sm:$0xff]
      %v473 = vld [vmem:[%s5 + $0x8] sm:$0xff]
      %v474 = vld [vmem:[%s5 + $0x10] sm:$0xff]
      %476 = vset.pattern.permute.xlu0 0
      %477 = vperm.xlu0 %476, %v472
      %v478 = vpop.permute.xlu0 %477
      %481 = vset.pattern.permute.xlu0 0
      %482 = vperm.xlu0 %481, %v473
      %v483 = vpop.permute.xlu0 %482
      %486 = vset.pattern.permute.xlu0 0
      %487 = vperm.xlu0 %486, %v474
      %v488 = vpop.permute.xlu0 %487
      %491 = vst [vmem:[#allocation1] ss:$2 sm:$0xff] %v468
      %v492 = vld.sshfl [vmem:[#allocation1] sm:$0xff pattern:$0x75316420]
      %v493 = vld.sshfl [vmem:[#allocation1 + $0x8] sm:$0xff pattern:$0x75316420]
      %vm494 = vcmask 31744
      %v496 = vsel %vm494, %v469, 0
      %v499 = vsel %vm494, %v470, 0
      %v502 = vsel %vm494, %v471, 0
      %vm504 = vcmask 1043456
      %v505 = vsel %vm504, %v492, 0
      %v507 = vsel %vm504, %v493, 0
      %509 = vmatpush.msra.mxu0 0.0
      %510 = vmatpush.msra.mxu0 0.0
      %511 = vmatpush.msra.mxu0 0.0
      %512 = vmatpush.msra.mxu0 0.0
      %513 = vmatpush.msra.mxu0 0.0
      %514 = vmatpush.msra.mxu0 0.0
      %515 = vmatpush.msra.mxu0 0.0
      %516 = vmatpush.msra.mxu0 0.0
      %517 = vmatpush.msra.mxu0 0.0
      %518 = vmatpush.msra.mxu0 0.0
      %519 = vmatpush.msra.mxu0 0.0
      %520 = vmatpush.msra.mxu0 0.0
      %521 = vmatpush.msra.mxu0 0.0
      %522 = vmatpush.msra.mxu0 0.0
      %523 = vmatpush.msra.mxu0 0.0
      %524 = vmatpush.msra.mxu0 %v505
      %525 = vmatmul.f32.gmra.mxu0 %v496
      %v526 = vpop.f32.mrf.mxu0
      %v527 = vadd.f32 %v478, %v526
      %528 = vmatmul.f32.gmra.mxu0 %v499
      %v529 = vpop.f32.mrf.mxu0
      %v530 = vadd.f32 %v483, %v529
      %531 = vmatmul.f32.gmra.mxu0 %v502
      %v532 = vpop.f32.mrf.mxu0
      %v533 = vadd.f32 %v488, %v532
      %534 = vdwg.mxu0
      %535 = vmatpush.msra.mxu0 0.0
      %536 = vmatpush.msra.mxu0 0.0
      %537 = vmatpush.msra.mxu0 0.0
      %538 = vmatpush.msra.mxu0 0.0
      %539 = vmatpush.msra.mxu0 0.0
      %540 = vmatpush.msra.mxu0 0.0
      %541 = vmatpush.msra.mxu0 0.0
      %542 = vmatpush.msra.mxu0 0.0
      %543 = vmatpush.msra.mxu0 0.0
      %544 = vmatpush.msra.mxu0 0.0
      %545 = vmatpush.msra.mxu0 0.0
      %546 = vmatpush.msra.mxu0 0.0
      %547 = vmatpush.msra.mxu0 0.0
      %548 = vmatpush.msra.mxu0 0.0
      %549 = vmatpush.msra.mxu0 0.0
      %550 = vmatpush.msra.mxu0 %v507
      %551 = vmatmul.f32.gmra.mxu0 %v496
      %v552 = vpop.f32.mrf.mxu0
      %v553 = vadd.f32 %v478, %v552
      %554 = vmatmul.f32.gmra.mxu0 %v499
      %v555 = vpop.f32.mrf.mxu0
      %v556 = vadd.f32 %v483, %v555
      %557 = vmatmul.f32.gmra.mxu0 %v502
      %v558 = vpop.f32.mrf.mxu0
      %v559 = vadd.f32 %v488, %v558
      %560 = vdwg.mxu0
      %v561 = vmax.f32 %v527, 0.0
      %v562 = vmax.f32 %v553, 0.0
      %v563 = vmax.f32 %v530, 0.0
      %v564 = vmax.f32 %v556, 0.0
      %v565 = vmax.f32 %v533, 0.0
      %v566 = vmax.f32 %v559, 0.0
      %567 = vst [vmem:[%s467] sm:$0xff] %v561
      %568 = vst [vmem:[%s467 + $0x8] sm:$0xff] %v562
      %569 = vrot.lane.b32.xlu0 %v563, 9
      %v570 = vpop.permute.xlu0 %569
      %571 = vrot.lane.b32.xlu0 %v565, 9
      %v572 = vpop.permute.xlu0 %571
      %573 = vrot.lane.b32.xlu0 %v564, 9
      %v574 = vpop.permute.xlu0 %573
      %575 = vrot.lane.b32.xlu0 %v566, 9
      %v576 = vpop.permute.xlu0 %575
      %v577 = vlaneseq
      %v578 = vand.u32 %v577, 127
      %vm579 = vcmp.lt.s32.totalorder %v578, 9
      %v580 = vsel %vm579, %v570, %v574
      %v581 = vsel %vm579, %v572, %v576
      %v582 = vsel %vm579, %v574, %v570
      %v583 = vsel %vm579, %v576, %v572
      %v584 = vld [vmem:[%s2] sm:$0x3]
      %v585 = vld [vmem:[%s1] sm:$0x3]
      %v586 = vmul.f32 %v584, %v585
      %v588 = vperm.slane %v586, 0
      %v589 = vperm.slane %v586, 1
      %v592 = vmul.f32 %v582, %v588
      %v593 = vmul.f32 %v580, %v589
      %v594 = vmul.f32 %v583, %v588
      %v595 = vmul.f32 %v581, %v589
      %596 = vrot.lane.b32.xlu0 %v563, 8
      %v597 = vpop.permute.xlu0 %596
      %598 = vrot.lane.b32.xlu0 %v565, 8
      %v599 = vpop.permute.xlu0 %598
      %600 = vrot.lane.b32.xlu0 %v564, 8
      %v601 = vpop.permute.xlu0 %600
      %602 = vrot.lane.b32.xlu0 %v566, 8
      %v603 = vpop.permute.xlu0 %602
      %vm604 = vcmp.lt.s32.totalorder %v578, 8
      %v605 = vsel %vm604, %v597, %v601
      %v606 = vsel %vm604, %v599, %v603
      %v607 = vsel %vm604, %v601, %v597
      %v608 = vsel %vm604, %v603, %v599
      %s609 = scalar_lea.vmem %s1, 2
      %v610 = vld [vmem:[%s609] sm:$0x3]
      %v611 = vmul.f32 %v584, %v610
      %v613 = vperm.slane %v611, 0
      %v614 = vperm.slane %v611, 1
      %v617 = vmul.f32 %v607, %v613
      %v618 = vmul.f32 %v605, %v614
      %v619 = vmul.f32 %v608, %v613
      %v620 = vmul.f32 %v606, %v614
      %621 = vrot.lane.b32.xlu0 %v563, 7
      %v622 = vpop.permute.xlu0 %621
      %623 = vrot.lane.b32.xlu0 %v565, 7
      %v624 = vpop.permute.xlu0 %623
      %625 = vrot.lane.b32.xlu0 %v564, 7
      %v626 = vpop.permute.xlu0 %625
      %627 = vrot.lane.b32.xlu0 %v566, 7
      %v628 = vpop.permute.xlu0 %627
      %vm629 = vcmp.lt.s32.totalorder %v578, 7
      %v630 = vsel %vm629, %v622, %v626
      %v631 = vsel %vm629, %v624, %v628
      %v632 = vsel %vm629, %v626, %v622
      %v633 = vsel %vm629, %v628, %v624
      %s634 = scalar_lea.vmem %s1, 4
      %v635 = vld [vmem:[%s634] sm:$0x3]
      %v636 = vmul.f32 %v584, %v635
      %v638 = vperm.slane %v636, 0
      %v639 = vperm.slane %v636, 1
      %v642 = vmul.f32 %v632, %v638
      %v643 = vmul.f32 %v630, %v639
      %v644 = vmul.f32 %v633, %v638
      %v645 = vmul.f32 %v631, %v639
      %646 = vrot.lane.b32.xlu0 %v563, 1
      %v647 = vpop.permute.xlu0 %646
      %648 = vrot.lane.b32.xlu0 %v565, 1
      %v649 = vpop.permute.xlu0 %648
      %650 = vrot.lane.b32.xlu0 %v564, 1
      %v651 = vpop.permute.xlu0 %650
      %652 = vrot.lane.b32.xlu0 %v566, 1
      %v653 = vpop.permute.xlu0 %652
      %vm654 = vcmp.lt.s32.totalorder %v578, 1
      %v655 = vsel %vm654, %v647, %v651
      %v656 = vsel %vm654, %v649, %v653
      %v657 = vsel %vm654, %v651, %v647
      %v658 = vsel %vm654, %v653, %v649
      %s659 = scalar_lea.vmem %s2, 2
      %v660 = vld [vmem:[%s659] sm:$0x3]
      %v661 = vmul.f32 %v660, %v585
      %v663 = vperm.slane %v661, 0
      %v664 = vperm.slane %v661, 1
      %v667 = vmul.f32 %v657, %v663
      %v668 = vmul.f32 %v655, %v664
      %v669 = vmul.f32 %v658, %v663
      %v670 = vmul.f32 %v656, %v664
      %v671 = vmul.f32 %v660, %v610
      %v673 = vperm.slane %v671, 0
      %v674 = vperm.slane %v671, 1
      %v677 = vmul.f32 %v563, %v673
      %v678 = vmul.f32 %v564, %v674
      %v679 = vmul.f32 %v565, %v673
      %v680 = vmul.f32 %v566, %v674
      %681 = vrot.lane.b32.xlu0 %v563, 127
      %v682 = vpop.permute.xlu0 %681
      %683 = vrot.lane.b32.xlu0 %v565, 127
      %v684 = vpop.permute.xlu0 %683
      %685 = vrot.lane.b32.xlu0 %v564, 127
      %v686 = vpop.permute.xlu0 %685
      %687 = vrot.lane.b32.xlu0 %v566, 127
      %v688 = vpop.permute.xlu0 %687
      %vm689 = vcmp.lt.s32.totalorder %v578, 127
      %v690 = vsel %vm689, %v682, %v686
      %v691 = vsel %vm689, %v684, %v688
      %v692 = vsel %vm689, %v686, %v682
      %v693 = vsel %vm689, %v688, %v684
      %v694 = vmul.f32 %v660, %v635
      %v696 = vperm.slane %v694, 0
      %v697 = vperm.slane %v694, 1
      %v700 = vmul.f32 %v690, %v696
      %v701 = vmul.f32 %v692, %v697
      %v702 = vmul.f32 %v691, %v696
      %v703 = vmul.f32 %v693, %v697
      %704 = vrot.lane.b32.xlu0 %v563, 121
      %v705 = vpop.permute.xlu0 %704
      %706 = vrot.lane.b32.xlu0 %v565, 121
      %v707 = vpop.permute.xlu0 %706
      %708 = vrot.lane.b32.xlu0 %v564, 121
      %v709 = vpop.permute.xlu0 %708
      %710 = vrot.lane.b32.xlu0 %v566, 121
      %v711 = vpop.permute.xlu0 %710
      %vm712 = vcmp.lt.s32.totalorder %v578, 121
      %v713 = vsel %vm712, %v705, %v709
      %v714 = vsel %vm712, %v707, %v711
      %v715 = vsel %vm712, %v709, %v705
      %v716 = vsel %vm712, %v711, %v707
      %s717 = scalar_lea.vmem %s2, 4
      %v718 = vld [vmem:[%s717] sm:$0x3]
      %v719 = vmul.f32 %v718, %v585
      %v721 = vperm.slane %v719, 0
      %v722 = vperm.slane %v719, 1
      %v725 = vmul.f32 %v713, %v721
      %v726 = vmul.f32 %v715, %v722
      %v727 = vmul.f32 %v714, %v721
      %v728 = vmul.f32 %v716, %v722
      %729 = vrot.lane.b32.xlu0 %v563, 120
      %v730 = vpop.permute.xlu0 %729
      %731 = vrot.lane.b32.xlu0 %v565, 120
      %v732 = vpop.permute.xlu0 %731
      %733 = vrot.lane.b32.xlu0 %v564, 120
      %v734 = vpop.permute.xlu0 %733
      %735 = vrot.lane.b32.xlu0 %v566, 120
      %v736 = vpop.permute.xlu0 %735
      %vm737 = vcmp.lt.s32.totalorder %v578, 120
      %v738 = vsel %vm737, %v730, %v734
      %v739 = vsel %vm737, %v732, %v736
      %v740 = vsel %vm737, %v734, %v730
      %v741 = vsel %vm737, %v736, %v732
      %v742 = vmul.f32 %v718, %v610
      %v744 = vperm.slane %v742, 0
      %v745 = vperm.slane %v742, 1
      %v748 = vmul.f32 %v738, %v744
      %v749 = vmul.f32 %v740, %v745
      %v750 = vmul.f32 %v739, %v744
      %v751 = vmul.f32 %v741, %v745
      %752 = vrot.lane.b32.xlu0 %v563, 119
      %v753 = vpop.permute.xlu0 %752
      %754 = vrot.lane.b32.xlu0 %v565, 119
      %v755 = vpop.permute.xlu0 %754
      %756 = vrot.lane.b32.xlu0 %v564, 119
      %v757 = vpop.permute.xlu0 %756
      %758 = vrot.lane.b32.xlu0 %v566, 119
      %v759 = vpop.permute.xlu0 %758
      %vm760 = vcmp.lt.s32.totalorder %v578, 119
      %v761 = vsel %vm760, %v753, %v757
      %v762 = vsel %vm760, %v755, %v759
      %v763 = vsel %vm760, %v757, %v753
      %v764 = vsel %vm760, %v759, %v755
      %v765 = vmul.f32 %v718, %v635
      %v767 = vperm.slane %v765, 0
      %v768 = vperm.slane %v765, 1
      %v771 = vmul.f32 %v761, %v767
      %v772 = vmul.f32 %v763, %v768
      %v773 = vmul.f32 %v762, %v767
      %v774 = vmul.f32 %v764, %v768
      %v775 = vld [vmem:[%s6] sm:$0xff]
      %v776 = vld [vmem:[%s6 + $0x8] sm:$0xff]
      %v777 = vld [vmem:[%s6 + $0x10] sm:$0xff]
      %v778 = vld [vmem:[%s6 + $0x18] sm:$0xff]
      %v779 = vld [vmem:[%s7] sm:$0xff]
      %v780 = vld [vmem:[%s7 + $0x8] sm:$0xff]
      %782 = vset.pattern.permute.xlu0 0
      %783 = vperm.xlu0 %782, %v779
      %v784 = vpop.permute.xlu0 %783
      %787 = vset.pattern.permute.xlu0 0
      %788 = vperm.xlu0 %787, %v780
      %v789 = vpop.permute.xlu0 %788
      %vm791 = vcmask 130048
      %v793 = vsel %vm791, %v776, 0
      %v796 = vsel %vm791, %v778, 0
      %798 = vmatpush.msra.mxu0 %v750
      %799 = vmatpush.msra.mxu0 %v748
      %800 = vmatpush.msra.mxu0 %v727
      %801 = vmatpush.msra.mxu0 %v725
      %802 = vmatpush.msra.mxu0 %v702
      %803 = vmatpush.msra.mxu0 %v700
      %804 = vmatpush.msra.mxu0 %v679
      %805 = vmatpush.msra.mxu0 %v677
      %806 = vmatpush.msra.mxu0 %v669
      %807 = vmatpush.msra.mxu0 %v667
      %808 = vmatpush.msra.mxu0 %v644
      %809 = vmatpush.msra.mxu0 %v642
      %810 = vmatpush.msra.mxu0 %v619
      %811 = vmatpush.msra.mxu0 %v617
      %812 = vmatpush.msra.mxu0 %v594
      %813 = vmatpush.msra.mxu0 %v592
      %814 = vmatmul.f32.gmra.mxu0 %v775
      %v815 = vpop.f32.mrf.mxu0
      %v816 = vadd.f32 %v784, %v815
      %817 = vmatmul.f32.gmra.mxu0 %v777
      %v818 = vpop.f32.mrf.mxu0
      %v819 = vadd.f32 %v789, %v818
      %820 = vdwg.mxu0
      %821 = vmatpush.msra.mxu0 0.0
      %822 = vmatpush.msra.mxu0 0.0
      %823 = vmatpush.msra.mxu0 0.0
      %824 = vmatpush.msra.mxu0 0.0
      %825 = vmatpush.msra.mxu0 0.0
      %826 = vmatpush.msra.mxu0 0.0
      %827 = vmatpush.msra.mxu0 0.0
      %828 = vmatpush.msra.mxu0 0.0
      %829 = vmatpush.msra.mxu0 0.0
      %830 = vmatpush.msra.mxu0 0.0
      %831 = vmatpush.msra.mxu0 0.0
      %832 = vmatpush.msra.mxu0 0.0
      %833 = vmatpush.msra.mxu0 0.0
      %834 = vmatpush.msra.mxu0 0.0
      %835 = vmatpush.msra.mxu0 %v773
      %836 = vmatpush.msra.mxu0 %v771
      %837 = vmatmul.f32.gmra.mxu0 %v793
      %v838 = vpop.f32.mrf.mxu0
      %v839 = vadd.f32 %v816, %v838
      %840 = vmatmul.f32.gmra.mxu0 %v796
      %v841 = vpop.f32.mrf.mxu0
      %v842 = vadd.f32 %v819, %v841
      %843 = vdwg.mxu0
      %844 = vmatpush.msra.mxu0 %v751
      %845 = vmatpush.msra.mxu0 %v749
      %846 = vmatpush.msra.mxu0 %v728
      %847 = vmatpush.msra.mxu0 %v726
      %848 = vmatpush.msra.mxu0 %v703
      %849 = vmatpush.msra.mxu0 %v701
      %850 = vmatpush.msra.mxu0 %v680
      %851 = vmatpush.msra.mxu0 %v678
      %852 = vmatpush.msra.mxu0 %v670
      %853 = vmatpush.msra.mxu0 %v668
      %854 = vmatpush.msra.mxu0 %v645
      %855 = vmatpush.msra.mxu0 %v643
      %856 = vmatpush.msra.mxu0 %v620
      %857 = vmatpush.msra.mxu0 %v618
      %858 = vmatpush.msra.mxu0 %v595
      %859 = vmatpush.msra.mxu0 %v593
      %860 = vmatmul.f32.gmra.mxu0 %v775
      %v861 = vpop.f32.mrf.mxu0
      %v862 = vadd.f32 %v784, %v861
      %863 = vmatmul.f32.gmra.mxu0 %v777
      %v864 = vpop.f32.mrf.mxu0
      %v865 = vadd.f32 %v789, %v864
      %866 = vdwg.mxu0
      %867 = vmatpush.msra.mxu0 0.0
      %868 = vmatpush.msra.mxu0 0.0
      %869 = vmatpush.msra.mxu0 0.0
      %870 = vmatpush.msra.mxu0 0.0
      %871 = vmatpush.msra.mxu0 0.0
      %872 = vmatpush.msra.mxu0 0.0
      %873 = vmatpush.msra.mxu0 0.0
      %874 = vmatpush.msra.mxu0 0.0
      %875 = vmatpush.msra.mxu0 0.0
      %876 = vmatpush.msra.mxu0 0.0
      %877 = vmatpush.msra.mxu0 0.0
      %878 = vmatpush.msra.mxu0 0.0
      %879 = vmatpush.msra.mxu0 0.0
      %880 = vmatpush.msra.mxu0 0.0
      %881 = vmatpush.msra.mxu0 %v774
      %882 = vmatpush.msra.mxu0 %v772
      %883 = vmatmul.f32.gmra.mxu0 %v793
      %v884 = vpop.f32.mrf.mxu0
      %v885 = vadd.f32 %v862, %v884
      %886 = vmatmul.f32.gmra.mxu0 %v796
      %v887 = vpop.f32.mrf.mxu0
      %v888 = vadd.f32 %v865, %v887
      %889 = vdwg.mxu0
      %v890 = vmax.f32 %v839, 0.0
      %v891 = vmax.f32 %v885, 0.0
      %v892 = vmax.f32 %v842, 0.0
      %v893 = vmax.f32 %v888, 0.0
      %894 = vrot.lane.b32.xlu0 %v890, 64
      %v895 = vpop.permute.xlu0 %894
      %896 = vrot.lane.b32.xlu0 %v892, 64
      %v897 = vpop.permute.xlu0 %896
      %898 = vrot.lane.b32.xlu0 %v891, 64
      %v899 = vpop.permute.xlu0 %898
      %900 = vrot.lane.b32.xlu0 %v893, 64
      %v901 = vpop.permute.xlu0 %900
      %vm902 = vcmp.lt.s32.totalorder %v578, 64
      %v903 = vsel %vm902, %v895, %v899
      %v904 = vsel %vm902, %v897, %v901
      %v905 = vsel %vm902, %v899, %v895
      %v906 = vsel %vm902, %v901, %v897
      %v907 = vld [vmem:[%s3] sm:$0x3]
      %v909 = vperm.slane %v907, 0
      %v910 = vperm.slane %v907, 1
      %v913 = vmul.f32 %v905, %v909
      %v914 = vmul.f32 %v903, %v910
      %v915 = vmul.f32 %v906, %v909
      %v916 = vmul.f32 %v904, %v910
      %s917 = scalar_lea.vmem %s3, 2
      %v918 = vld [vmem:[%s917] sm:$0x3]
      %v920 = vperm.slane %v918, 0
      %v921 = vperm.slane %v918, 1
      %v924 = vmul.f32 %v890, %v920
      %v925 = vmul.f32 %v891, %v921
      %v926 = vmul.f32 %v892, %v920
      %v927 = vmul.f32 %v893, %v921
      %s928 = scalar_lea.vmem %s3, 4
      %v929 = vld [vmem:[%s928] sm:$0x3]
      %v931 = vperm.slane %v929, 0
      %v932 = vperm.slane %v929, 1
      %v935 = vmul.f32 %v903, %v931
      %v936 = vmul.f32 %v905, %v932
      %v937 = vmul.f32 %v904, %v931
      %v938 = vmul.f32 %v906, %v932
      %v939 = vld [vmem:[%s8] sm:$0xff]
      %v940 = vld [vmem:[%s8 + $0x8] sm:$0xff]
      %v941 = vld [vmem:[%s9] sm:$0xff]
      %v942 = vld [vmem:[%s9 + $0x8] sm:$0xff]
      %944 = vset.pattern.permute.xlu0 0
      %945 = vperm.xlu0 %944, %v941
      %v946 = vpop.permute.xlu0 %945
      %949 = vset.pattern.permute.xlu0 0
      %950 = vperm.xlu0 %949, %v942
      %v951 = vpop.permute.xlu0 %950
      %vm953 = vcmask 392192
      %v955 = vsel %vm953, %v939, 0
      %v958 = vsel %vm953, %v940, 0
      %960 = vmatpush.msra.mxu0 0.0
      %961 = vmatpush.msra.mxu0 0.0
      %962 = vmatpush.msra.mxu0 0.0
      %963 = vmatpush.msra.mxu0 0.0
      %964 = vmatpush.msra.mxu0 0.0
      %965 = vmatpush.msra.mxu0 0.0
      %966 = vmatpush.msra.mxu0 0.0
      %967 = vmatpush.msra.mxu0 0.0
      %968 = vmatpush.msra.mxu0 0.0
      %969 = vmatpush.msra.mxu0 0.0
      %970 = vmatpush.msra.mxu0 %v937
      %971 = vmatpush.msra.mxu0 %v935
      %972 = vmatpush.msra.mxu0 %v926
      %973 = vmatpush.msra.mxu0 %v924
      %974 = vmatpush.msra.mxu0 %v915
      %975 = vmatpush.msra.mxu0 %v913
      %976 = vmatmul.f32.gmra.mxu0 %v955
      %v977 = vpop.f32.mrf.mxu0
      %v978 = vadd.f32 %v946, %v977
      %979 = vmatmul.f32.gmra.mxu0 %v958
      %v980 = vpop.f32.mrf.mxu0
      %v981 = vadd.f32 %v951, %v980
      %982 = vdwg.mxu0
      %983 = vmatpush.msra.mxu0 0.0
      %984 = vmatpush.msra.mxu0 0.0
      %985 = vmatpush.msra.mxu0 0.0
      %986 = vmatpush.msra.mxu0 0.0
      %987 = vmatpush.msra.mxu0 0.0
      %988 = vmatpush.msra.mxu0 0.0
      %989 = vmatpush.msra.mxu0 0.0
      %990 = vmatpush.msra.mxu0 0.0
      %991 = vmatpush.msra.mxu0 0.0
      %992 = vmatpush.msra.mxu0 0.0
      %993 = vmatpush.msra.mxu0 %v938
      %994 = vmatpush.msra.mxu0 %v936
      %995 = vmatpush.msra.mxu0 %v927
      %996 = vmatpush.msra.mxu0 %v925
      %997 = vmatpush.msra.mxu0 %v916
      %998 = vmatpush.msra.mxu0 %v914
      %999 = vmatmul.f32.gmra.mxu0 %v955
      %v1000 = vpop.f32.mrf.mxu0
      %v1001 = vadd.f32 %v946, %v1000
      %1002 = vmatmul.f32.gmra.mxu0 %v958
      %v1003 = vpop.f32.mrf.mxu0
      %v1004 = vadd.f32 %v951, %v1003
      %1005 = vdwg.mxu0
      %v1006 = vmax.f32 %v978, 0.0
      %v1007 = vmax.f32 %v1001, 0.0
      %v1008 = vmax.f32 %v981, 0.0
      %v1009 = vmax.f32 %v1004, 0.0
      %v1010 = vadd.f32 %v1006, %v1007
      %1011 = vadd.xlane.f32.xlu0 %v1010
      %v1012 = vpop.xlane.xlu0 %1011
      %v1013 = vadd.f32 %v1008, %v1009
      %1014 = vadd.xlane.f32.xlu0 %v1013
      %v1015 = vpop.xlane.xlu0 %1014
      %v1016 = vrcp.pop 256.0
      %v1017 = vmul.f32 256.0, %v1016
      %v1018 = vsub.f32 1.0, %v1017
      %v1019 = vmul.f32 %v1016, %v1018
      %v1020 = vadd.f32 %v1016, %v1019
      %vm1021 = vweird.f32 %v1016
      %v1022 = vsel %vm1021, %v1016, %v1020
      %v1023 = vmul.f32 %v1012, %v1022
      %v1024 = vmul.f32 %v1015, %v1022
      %v1025 = vld [vmem:[%s10] sm:$0xff]
      %v1026 = vld [vmem:[%s10 + $0x8] sm:$0xff]
      %v1027 = vld [vmem:[%s11] sm:$0xff]
      %v1028 = vld [vmem:[%s11 + $0x8] sm:$0xff]
      %v1030 = vsel %vm791, %v1025, 0
      %v1033 = vsel %vm791, %v1026, 0
      %1035 = vmatpush.msra.mxu0 0.0
      %1036 = vmatpush.msra.mxu0 0.0
      %1037 = vmatpush.msra.mxu0 0.0
      %1038 = vmatpush.msra.mxu0 0.0
      %1039 = vmatpush.msra.mxu0 0.0
      %1040 = vmatpush.msra.mxu0 0.0
      %1041 = vmatpush.msra.mxu0 0.0
      %1042 = vmatpush.msra.mxu0 0.0
      %1043 = vmatpush.msra.mxu0 0.0
      %1044 = vmatpush.msra.mxu0 0.0
      %1045 = vmatpush.msra.mxu0 0.0
      %1046 = vmatpush.msra.mxu0 0.0
      %1047 = vmatpush.msra.mxu0 0.0
      %1048 = vmatpush.msra.mxu0 0.0
      %1049 = vmatpush.msra.mxu0 %v1024
      %1050 = vmatpush.msra.mxu0 %v1023
      %1051 = vmatmul.f32.gmra.mxu0 %v1030
      %v1052 = vpop.f32.mrf.mxu0
      %v1053 = vadd.f32 %v1027, %v1052
      %1054 = vmatmul.f32.gmra.mxu0 %v1033
      %v1055 = vpop.f32.mrf.mxu0
      %v1056 = vadd.f32 %v1028, %v1055
      %1057 = vdwg.mxu0
      %v1058 = vsub.f32 0.0, %v1053
      %v1059 = vsub.f32 0.0, %v1056
      %v1060 = vmul.f32 %v1058, 1.442695
      %v1061 = vpow.pop %v1060
      %v1062 = vmul.f32 %v1059, 1.442695
      %v1063 = vpow.pop %v1062
      %v1064 = vadd.f32 %v1061, 1.0
      %v1065 = vadd.f32 %v1063, 1.0
      %v1066 = vrcp.pop %v1064
      %v1067 = vrcp.pop %v1065
      %1069 = vset.pattern.permute.xlu0 0
      %1070 = vperm.xlu0 %1069, %v1066
      %v1071 = vpop.permute.xlu0 %1070
      %1074 = vset.pattern.permute.xlu0 0
      %1075 = vperm.xlu0 %1074, %v1067
      %v1076 = vpop.permute.xlu0 %1075
      %v1078 = vmul.f32 %v1006, %v1071
      %v1079 = vmul.f32 %v1007, %v1071
      %v1080 = vmul.f32 %v1008, %v1076
      %v1081 = vmul.f32 %v1009, %v1076
      %1082 = vst [vmem:[%s467 + $0x10] sm:$0xff] %v1078
      %1083 = vst [vmem:[%s467 + $0x18] sm:$0xff] %v1079
      %1084 = vst [vmem:[%s467 + $0x20] sm:$0xff] %v1080
      %1085 = vst [vmem:[%s467 + $0x28] sm:$0xff] %v1081
      %v1086 = vld [vmem:[%s1] sm:$0x3]
      %v1087 = vld [vmem:[%s634] sm:$0x3]
      %1088 = vst [vmem:[#allocation1] ss:$2 sm:$0xff] %v468
      %v1089 = vld.sshfl [vmem:[#allocation1] sm:$0xff pattern:$0x75316420]
      %v1090 = vld.sshfl [vmem:[#allocation1 + $0x8] sm:$0xff pattern:$0x75316420]
      %1093 = vrot.lane.b32.xlu0 %v1089, 1
      %v1094 = vpop.permute.xlu0 %1093
      %1095 = vrot.lane.b32.xlu0 %v1090, 1
      %v1096 = vpop.permute.xlu0 %1095
      %v1097 = vsel %vm654, %v1094, %v1096
      %v1098 = vsel %vm654, %v1096, %v1094
      %v1100 = vperm.slane %v1086, 0
      %v1101 = vperm.slane %v1086, 1
      %v1104 = vmul.f32 %v1098, %v1100
      %v1105 = vmul.f32 %v1097, %v1101
      %v1106 = vsub.f32 %v1086, 1.0
      %v1107 = vmul.f32 %v1106, 3e+38
      %v1109 = vperm.slane %v1107, 0
      %v1110 = vperm.slane %v1107, 1
      %v1113 = vadd.f32 %v1104, %v1109
      %v1114 = vadd.f32 %v1105, %v1110
      %1115 = vst [vmem:[#allocation1] ss:$2 sm:$0xff] %v468
      %v1116 = vld.sshfl [vmem:[#allocation1] sm:$0xff pattern:$0x75316420]
      %v1117 = vld.sshfl [vmem:[#allocation1 + $0x8] sm:$0xff pattern:$0x75316420]
      %1120 = vrot.lane.b32.xlu0 %v1116, 127
      %v1121 = vpop.permute.xlu0 %1120
      %1122 = vrot.lane.b32.xlu0 %v1117, 127
      %v1123 = vpop.permute.xlu0 %1122
      %v1124 = vsel %vm689, %v1121, %v1123
      %v1125 = vsel %vm689, %v1123, %v1121
      %v1127 = vperm.slane %v1087, 0
      %v1128 = vperm.slane %v1087, 1
      %v1131 = vmul.f32 %v1124, %v1127
      %v1132 = vmul.f32 %v1125, %v1128
      %v1133 = vsub.f32 %v1087, 1.0
      %v1134 = vmul.f32 %v1133, 3e+38
      %v1136 = vperm.slane %v1134, 0
      %v1137 = vperm.slane %v1134, 1
      %v1140 = vadd.f32 %v1131, %v1136
      %v1141 = vadd.f32 %v1132, %v1137
      %1142 = vst [vmem:[#allocation1] ss:$2 sm:$0xff] %v468
      %v1143 = vld.sshfl [vmem:[#allocation1] sm:$0xff pattern:$0x75316420]
      %v1144 = vld.sshfl [vmem:[#allocation1 + $0x8] sm:$0xff pattern:$0x75316420]
      %v1147 = vmax.f32 %v1113, %v1143
      %v1148 = vmax.f32 %v1114, %v1144
      %v1149 = vmax.f32 %v1147, %v1140
      %v1150 = vmax.f32 %v1148, %v1141
      %v1151 = vld [vmem:[%s2] sm:$0x3]
      %v1152 = vld [vmem:[%s717] sm:$0x3]
      %1153 = vrot.lane.b32.xlu0 %v1149, 8
      %v1154 = vpop.permute.xlu0 %1153
      %1155 = vrot.lane.b32.xlu0 %v1150, 8
      %v1156 = vpop.permute.xlu0 %1155
      %v1157 = vsel %vm604, %v1154, %v1156
      %v1158 = vsel %vm604, %v1156, %v1154
      %v1160 = vperm.slane %v1151, 0
      %v1161 = vperm.slane %v1151, 1
      %v1164 = vmul.f32 %v1158, %v1160
      %v1165 = vmul.f32 %v1157, %v1161
      %v1166 = vsub.f32 %v1151, 1.0
      %v1167 = vmul.f32 %v1166, 3e+38
      %v1169 = vperm.slane %v1167, 0
      %v1170 = vperm.slane %v1167, 1
      %v1173 = vadd.f32 %v1164, %v1169
      %v1174 = vadd.f32 %v1165, %v1170
      %1175 = vrot.lane.b32.xlu0 %v1149, 120
      %v1176 = vpop.permute.xlu0 %1175
      %1177 = vrot.lane.b32.xlu0 %v1150, 120
      %v1178 = vpop.permute.xlu0 %1177
      %v1179 = vsel %vm737, %v1176, %v1178
      %v1180 = vsel %vm737, %v1178, %v1176
      %v1182 = vperm.slane %v1152, 0
      %v1183 = vperm.slane %v1152, 1
      %v1186 = vmul.f32 %v1179, %v1182
      %v1187 = vmul.f32 %v1180, %v1183
      %v1188 = vsub.f32 %v1152, 1.0
      %v1189 = vmul.f32 %v1188, 3e+38
      %v1191 = vperm.slane %v1189, 0
      %v1192 = vperm.slane %v1189, 1
      %v1195 = vadd.f32 %v1186, %v1191
      %v1196 = vadd.f32 %v1187, %v1192
      %v1197 = vmax.f32 %v1173, %v1149
      %v1198 = vmax.f32 %v1174, %v1150
      %v1199 = vmax.f32 %v1197, %v1195
      %v1200 = vmax.f32 %v1198, %v1196
      %v1201 = vld [vmem:[%s3] sm:$0x3]
      %v1202 = vld [vmem:[%s928] sm:$0x3]
      %1203 = vrot.lane.b32.xlu0 %v1199, 64
      %v1204 = vpop.permute.xlu0 %1203
      %1205 = vrot.lane.b32.xlu0 %v1200, 64
      %v1206 = vpop.permute.xlu0 %1205
      %v1207 = vsel %vm902, %v1204, %v1206
      %v1208 = vsel %vm902, %v1206, %v1204
      %v1210 = vperm.slane %v1201, 0
      %v1211 = vperm.slane %v1201, 1
      %v1214 = vmul.f32 %v1208, %v1210
      %v1215 = vmul.f32 %v1207, %v1211
      %v1216 = vsub.f32 %v1201, 1.0
      %v1217 = vmul.f32 %v1216, 3e+38
      %v1219 = vperm.slane %v1217, 0
      %v1220 = vperm.slane %v1217, 1
      %v1223 = vadd.f32 %v1214, %v1219
      %v1224 = vadd.f32 %v1215, %v1220
      %v1226 = vperm.slane %v1202, 0
      %v1227 = vperm.slane %v1202, 1
      %v1230 = vmul.f32 %v1207, %v1226
      %v1231 = vmul.f32 %v1208, %v1227
      %v1232 = vsub.f32 %v1202, 1.0
      %v1233 = vmul.f32 %v1232, 3e+38
      %v1235 = vperm.slane %v1233, 0
      %v1236 = vperm.slane %v1233, 1
      %v1239 = vadd.f32 %v1230, %v1235
      %v1240 = vadd.f32 %v1231, %v1236
      %v1241 = vmax.f32 %v1223, %v1199
      %v1242 = vmax.f32 %v1224, %v1200
      %v1243 = vmax.f32 %v1241, %v1239
      %v1244 = vmax.f32 %v1242, %v1240
      %v1245 = vld [vmem:[%s12] sm:$0xff]
      %v1246 = vld [vmem:[%s13] sm:$0xff]
      %1248 = vset.pattern.permute.xlu0 0
      %1249 = vperm.xlu0 %1248, %v1246
      %v1250 = vpop.permute.xlu0 %1249
      %v1253 = vsel %vm494, %v1245, 0
      %v1256 = vsel %vm504, %v1243, 0
      %v1259 = vsel %vm504, %v1244, 0
      %1261 = vmatpush.msra.mxu0 0.0
      %1262 = vmatpush.msra.mxu0 0.0
      %1263 = vmatpush.msra.mxu0 0.0
      %1264 = vmatpush.msra.mxu0 0.0
      %1265 = vmatpush.msra.mxu0 0.0
      %1266 = vmatpush.msra.mxu0 0.0
      %1267 = vmatpush.msra.mxu0 0.0
      %1268 = vmatpush.msra.mxu0 0.0
      %1269 = vmatpush.msra.mxu0 0.0
      %1270 = vmatpush.msra.mxu0 0.0
      %1271 = vmatpush.msra.mxu0 0.0
      %1272 = vmatpush.msra.mxu0 0.0
      %1273 = vmatpush.msra.mxu0 0.0
      %1274 = vmatpush.msra.mxu0 0.0
      %1275 = vmatpush.msra.mxu0 0.0
      %1276 = vmatpush.msra.mxu0 %v1256
      %1277 = vmatmul.f32.gmra.mxu0 %v1253
      %v1278 = vpop.f32.mrf.mxu0
      %v1279 = vadd.f32 %v1250, %v1278
      %1280 = vdwg.mxu0
      %1281 = vmatpush.msra.mxu0 0.0
      %1282 = vmatpush.msra.mxu0 0.0
      %1283 = vmatpush.msra.mxu0 0.0
      %1284 = vmatpush.msra.mxu0 0.0
      %1285 = vmatpush.msra.mxu0 0.0
      %1286 = vmatpush.msra.mxu0 0.0
      %1287 = vmatpush.msra.mxu0 0.0
      %1288 = vmatpush.msra.mxu0 0.0
      %1289 = vmatpush.msra.mxu0 0.0
      %1290 = vmatpush.msra.mxu0 0.0
      %1291 = vmatpush.msra.mxu0 0.0
      %1292 = vmatpush.msra.mxu0 0.0
      %1293 = vmatpush.msra.mxu0 0.0
      %1294 = vmatpush.msra.mxu0 0.0
      %1295 = vmatpush.msra.mxu0 0.0
      %1296 = vmatpush.msra.mxu0 %v1259
      %1297 = vmatmul.f32.gmra.mxu0 %v1253
      %v1298 = vpop.f32.mrf.mxu0
      %v1299 = vadd.f32 %v1250, %v1298
      %1300 = vdwg.mxu0
      %v1301 = vmax.f32 %v1279, 0.0
      %v1302 = vmax.f32 %v1299, 0.0
      %1303 = vst [vmem:[%s467 + $0x30] sm:$0xff] %v1301
      %1304 = vst [vmem:[%s467 + $0x38] sm:$0xff] %v1302
      %p1305 = scmp.lt.s32.totalorder %s25, 1
      %s1306 = scalar_select %p1305, %s25, 1
      %s1307 = smul.addr %s1306, 8
      %s1308 = smul.addr %s1307, 8
      %s1309 = scalar_lea.vmem %s14, %s1308
      // Predicated region
      $region77: #{sep_inc_forward.1} parent=75 // pred_check
        %p1310 = pneg %p342
      $region78: #{sep_inc_forward.1} parent=75 // pred_check_branch
        %1312 = sbr.rel (%p1310) target = $region80
      $region79: #{sep_inc_forward.1} parent=75 // pred_region
        _
      $region80: #{sep_inc_forward.1} parent=75 // pred_fallthru
        _
    $region76: #{sep_inc_forward.1} parent=5 // pred_fallthru
      _
    %p1313 = scmp.le.s32.totalorder 2, %s20
    // Predicated region
    $region81: #{sep_inc_forward.1} parent=5 // pred_check
      %p1314 = pneg %p1313
    $region82: #{sep_inc_forward.1} parent=5 // pred_check_branch
      %1316 = sbr.rel (%p1314) target = $region84
    $region83: #{sep_inc_forward.1} parent=5 // pred_region
      %s1317 = ssub.s32 %s20, 2
      // Predicated region
      $region85: #{sep_inc_forward.1} parent=83 // pred_check
        %p1318 = pneg %p348
      $region86: #{sep_inc_forward.1} parent=83 // pred_check_branch
        %1320 = sbr.rel (%p1318) target = $region88
      $region87: #{sep_inc_forward.1} parent=83 // pred_region
        %p1321 = scmp.lt.s32.totalorder %s26, 1
        %s1322 = scalar_select %p1321, %s26, 1
        %s1323 = smul.addr %s1322, 8
        %s1324 = smul.addr %s1323, 8
        %s1325 = scalar_lea.vmem %s14, %s1324
      $region88: #{sep_inc_forward.1} parent=83 // pred_fallthru
        _
    $region84: #{sep_inc_forward.1} parent=5 // pred_fallthru
      _
  $region6: #{sep_inc_forward.1} parent=0 // loop_footer
    %s24 = sadd.s32 1, %s20
  $region7: #{sep_inc_forward.1} parent=0 // loop_footer_branch
    %19 = sbr.rel target = $region3
  $region8: #{sep_inc_forward.1} parent=0 // loop_exit
    _

</llo_original>
